<compile_context>
chip_gen: v7x
topology: tpu7x:2x2x1
jax: 0.10.0
libtpu: 0.0.40
codegen_flags: <defaults>
</compile_context>

<pallas_src>
import jax
import jax.numpy as jnp
import numpy as np
from jax.experimental import pallas as pl
from jax.experimental.pallas import tpu as pltpu


def _round_up(a, b):
    return (a + b - 1) // b * b


# ----------------------------------------------------------------------------
# distance_field kernel
#   grid = (n_tiles, m_tiles); m axis is the reduction ("arbitrary") axis.
#   xt block   : (2, tile_n)        query coords, queries on lanes
#   b  block   : (m_chunk, 2)       boundary chunk, boundary pts on sublanes
#   out block  : (1, 1, tile_n)     lane-dense min distance per query
#   acc scratch: (m_chunk, tile_n)  running elementwise min of squared dists
# ----------------------------------------------------------------------------
def _distance_field_kernel(xt_ref, b_ref, out_ref, acc_ref):
    j = pl.program_id(1)

    qx = xt_ref[0:1, :]                      # (1, tile_n)
    qy = xt_ref[1:2, :]                      # (1, tile_n)
    bx = b_ref[:, 0:1]                       # (m_chunk, 1)
    by = b_ref[:, 1:2]                       # (m_chunk, 1)

    dx = bx - qx                             # (m_chunk, tile_n)  VPU
    dy = by - qy
    d2 = dx * dx + dy * dy                   # squared distances (VPU only)

    @pl.when(j == 0)
    def _():
        acc_ref[...] = d2

    @pl.when(j > 0)
    def _():
        acc_ref[...] = jnp.minimum(acc_ref[...], d2)

    # One cross-sublane (XLU) reduce per query tile, lane-dense store.
    @pl.when(j == pl.num_programs(1) - 1)
    def _():
        mind2 = jnp.min(acc_ref[...], axis=0, keepdims=True)     # (1, tile_n)
        out_ref[...] = jnp.sqrt(mind2).reshape(out_ref.shape)


def distance_field_encode(x, boundary_points, *, tile_n=512, m_chunk=256):
    """x: (N, 2), boundary_points: (M, 2) -> (N, 3) = concat([x, min_dist])."""
    n, d = x.shape
    m, db = boundary_points.shape
    assert d == 2 and db == 2

    tile_n = min(tile_n, _round_up(n, 128))      # lane axis: multiple of 128
    m_chunk = min(m_chunk, _round_up(m, 8))      # sublane axis: multiple of 8
    n_pad = _round_up(n, tile_n)
    m_pad = _round_up(m, m_chunk)
    n_tiles = n_pad // tile_n
    m_tiles = m_pad // m_chunk

    # Query points transposed so N maps to the 128-lane axis.
    xt = jnp.pad(x.astype(jnp.float32), ((0, n_pad - n), (0, 0))).T  # (2, n_pad)
    # Pad boundary rows with a large (finite) sentinel so padded points can
    # never win the min (1e18^2 = 1e36 stays finite in f32).
    b = jnp.pad(boundary_points.astype(jnp.float32),
                ((0, m_pad - m), (0, 0)), constant_values=1e18)      # (m_pad, 2)
    # TODO(synk): for very large M (>~1e5) stream boundary slabs from a
    # pl.ANY/HBM ref instead of lane-padded (m_chunk, 2) blocks.

    dist = pl.pallas_call(
        _distance_field_kernel,
        out_shape=jax.ShapeDtypeStruct((n_tiles, 1, tile_n), jnp.float32),
        grid_spec=pltpu.PrefetchScalarGridSpec(
            num_scalar_prefetch=0,
            grid=(n_tiles, m_tiles),
            in_specs=[
                pl.BlockSpec((2, tile_n), lambda i, j: (0, i)),
                pl.BlockSpec((m_chunk, 2), lambda i, j: (j, 0)),
            ],
            out_specs=pl.BlockSpec((1, 1, tile_n), lambda i, j: (i, 0, 0)),
            scratch_shapes=[pltpu.VMEM((m_chunk, tile_n), jnp.float32)],
        ),
        compiler_params=pltpu.CompilerParams(
            dimension_semantics=("parallel", "arbitrary")),
    )(xt, b)

    dist = dist.reshape(n_pad)[:n, None].astype(x.dtype)         # (N, 1)
    return jnp.concatenate([x, dist], axis=-1)                   # (N, 3)


# ----------------------------------------------------------------------------
# learnable kernel:
#   Linear(2,128) -> Tanh -> Linear(128,128) -> Tanh -> Linear(128,2)
# ----------------------------------------------------------------------------
def _mlp_kernel(x_ref, w1_ref, b1_ref, w2_ref, b2_ref, w3_ref, b3_ref, out_ref):
    x = x_ref[...]                                               # (TN, 2) f32
    # Layer 1 has a contraction of only K=2: do it on the VPU as two
    # broadcast FMAs instead of an MXU matmul (which would pad K to 128/256).
    h1 = jnp.tanh(x[:, 0:1] * w1_ref[0:1, :]
                  + x[:, 1:2] * w1_ref[1:2, :]
                  + b1_ref[...])                                 # (TN, 128)
    h1 = h1.astype(w2_ref.dtype)                                 # bf16 on v6e/v7x
    h2 = jnp.tanh(
        jnp.dot(h1, w2_ref[...], preferred_element_type=jnp.float32)
        + b2_ref[...])                                           # (TN, 128)
    h2 = h2.astype(w3_ref.dtype)
    out = (jnp.dot(h2, w3_ref[...], preferred_element_type=jnp.float32)
           + b3_ref[...])                                        # (TN, 2)
    out_ref[...] = out.astype(out_ref.dtype)


def learnable_encode(x, params, *, tile_n=256, compute_dtype=jnp.float32):
    """x: (N, 2), params: MLP weights -> (N, 2).

    compute_dtype=jnp.bfloat16 enables bf16 MXU operands (v6e/v7x); the
    default f32 path is safe for v5e (no bf16 VPU/EUP there).
    """
    n, d = x.shape
    assert d == 2

    tile_n = min(tile_n, _round_up(n, 8))
    n_pad = _round_up(n, tile_n)
    xp = jnp.pad(x.astype(jnp.float32), ((0, n_pad - n), (0, 0)))

    w1 = params["w1"].astype(jnp.float32)                # (2,128)   f32 (VPU)
    b1 = params["b1"].astype(jnp.float32)                # (1,128)   f32
    w2 = params["w2"].astype(compute_dtype)              # (128,128) MXU operand
    b2 = params["b2"].astype(jnp.float32)                # (1,128)   f32
    w3 = params["w3"].astype(compute_dtype)              # (128,2)   MXU operand
    b3 = params["b3"].astype(jnp.float32)                # (1,2)     f32

    def full(shape):
        return pl.BlockSpec(shape, lambda i, _s=len(shape): (0,) * _s)

    out = pl.pallas_call(
        _mlp_kernel,
        out_shape=jax.ShapeDtypeStruct((n_pad, 2), x.dtype),
        grid_spec=pltpu.PrefetchScalarGridSpec(
            num_scalar_prefetch=0,
            grid=(n_pad // tile_n,),
            in_specs=[
                pl.BlockSpec((tile_n, 2), lambda i: (i, 0)),
                full(w1.shape), full(b1.shape),
                full(w2.shape), full(b2.shape),
                full(w3.shape), full(b3.shape),
            ],
            out_specs=pl.BlockSpec((tile_n, 2), lambda i: (i, 0)),
        ),
        compiler_params=pltpu.CompilerParams(
            dimension_semantics=("parallel",)),
    )(xp, w1, b1, w2, b2, w3, b3)
    return out[:n]


# ----------------------------------------------------------------------------
# Module-level wrapper (mirrors GeometryEncoder.forward)
# ----------------------------------------------------------------------------
def init_learnable_params(key):
    k1, k2, k3 = jax.random.split(key, 3)
    # deterministic, small-scale init (synthetic weights, not a checkpoint)
    return {
        "w1": jax.random.normal(k1, (2, 128), jnp.float32) * 0.1,
        "b1": jnp.zeros((1, 128), jnp.float32),
        "w2": jax.random.normal(k2, (128, 128), jnp.float32) * 0.1,
        "b2": jnp.zeros((1, 128), jnp.float32),
        "w3": jax.random.normal(k3, (128, 2), jnp.float32) * 0.1,
        "b3": jnp.zeros((1, 2), jnp.float32),
    }


def geometry_encoder(x, boundary_points=None, *, method="distance_field",
                     params=None, **kwargs):
    if method == "identity":
        return x
    elif method == "distance_field":
        if boundary_points is None:
            raise ValueError(
                "Boundary points must be provided for distance field encoding")
        return distance_field_encode(x, boundary_points, **kwargs)
    elif method == "learnable":
        return learnable_encode(x, params, **kwargs)
    else:
        raise ValueError(f"Unknown geometry encoding method: {method}")


# ----------------------------------------------------------------------------
# Pure-JAX references for verification
# ----------------------------------------------------------------------------
def _ref_distance_field(x, b):
    diffs = x[:, None, :] - b[None, :, :]
    dist = jnp.linalg.norm(diffs, axis=2)
    return jnp.concatenate([x, jnp.min(dist, axis=1, keepdims=True)], axis=-1)


def _ref_learnable(x, p):
    h = jnp.tanh(x @ p["w1"] + p["b1"])
    h = jnp.tanh(h @ p["w2"] + p["b2"])
    return h @ p["w3"] + p["b3"]


if __name__ == "__main__":
    key = jax.random.PRNGKey(0)
    kx, kb, kp = jax.random.split(key, 3)

    # Small shapes, deliberately NOT multiples of the tile sizes, to exercise
    # the padding paths (N padded to tile_n, M padded with the 1e18 sentinel)
    # while still producing multi-step grids on both axes.
    n_query, n_boundary = 1000, 300
    x = jax.random.uniform(kx, (n_query, 2), jnp.float32)            # query pts
    boundary = jax.random.uniform(kb, (n_boundary, 2), jnp.float32)  # boundary

    # --- distance_field (default method) ---
    out_df = geometry_encoder(x, boundary, method="distance_field")
    out_df = jax.block_until_ready(out_df)
    ref_df = _ref_distance_field(x, boundary)
    np.testing.assert_allclose(np.asarray(out_df), np.asarray(ref_df),
                               rtol=1e-5, atol=1e-5)

    # --- learnable method (f32 path, v5e-safe default) ---
    params = init_learnable_params(kp)
    out_mlp = geometry_encoder(x, method="learnable", params=params)
    out_mlp = jax.block_until_ready(out_mlp)
    ref_mlp = _ref_learnable(x, params)
    np.testing.assert_allclose(np.asarray(out_mlp), np.asarray(ref_mlp),
                               rtol=1e-4, atol=1e-4)

    # --- learnable method (bf16 MXU operands, v6e/v7x knob) ---
    out_bf16 = learnable_encode(x, params, compute_dtype=jnp.bfloat16)
    out_bf16 = jax.block_until_ready(out_bf16)
    np.testing.assert_allclose(np.asarray(out_bf16), np.asarray(ref_mlp),
                               rtol=5e-2, atol=5e-2)

    # --- identity method ---
    out_id = geometry_encoder(x, method="identity")
    out_id = jax.block_until_ready(out_id)
    assert out_id.shape == x.shape

    print("KERNEL_OK")
</pallas_src>

<mosaic_0001>
module attributes {stable_mosaic.version = 11 : i64} {
  func.func @_distance_field_kernel(%arg0: i32, %arg1: i32, %arg2: memref<2x512xf32, #tpu.memory_space<vmem>>, %arg3: memref<256x2xf32, #tpu.memory_space<vmem>>, %arg4: memref<1x1x512xf32, #tpu.memory_space<vmem>>, %arg5: memref<256x512xf32, #tpu.memory_space<vmem>>) attributes {dimension_semantics = [#tpu.dimension_semantics<parallel>, #tpu.dimension_semantics<arbitrary>], iteration_bounds = array<i64: 2, 2>, scalar_prefetch = 0 : i64, scratch_operands = 1 : i64, tpu.core_type = #tpu.core_type<tc>, window_params = [{transform_indices = @transform_0, window_bounds = array<i64: 2, 512>}, {transform_indices = @transform_1, window_bounds = array<i64: 256, 2>}, {transform_indices = @transform_2, window_bounds = array<i64: 1, 1, 512>}]} {
    %c0 = arith.constant 0 : index
    %c0_0 = arith.constant 0 : index
    %0 = vector.load %arg2[%c0, %c0_0] : memref<2x512xf32, #tpu.memory_space<vmem>>, vector<1x512xf32>
    %c1 = arith.constant 1 : index
    %c0_1 = arith.constant 0 : index
    %1 = vector.load %arg2[%c1, %c0_1] : memref<2x512xf32, #tpu.memory_space<vmem>>, vector<1x512xf32>
    %c0_2 = arith.constant 0 : index
    %c0_3 = arith.constant 0 : index
    %2 = vector.load %arg3[%c0_2, %c0_3] : memref<256x2xf32, #tpu.memory_space<vmem>>, vector<256x1xf32>
    %c0_4 = arith.constant 0 : index
    %c1_5 = arith.constant 1 : index
    %3 = vector.load %arg3[%c0_4, %c1_5] : memref<256x2xf32, #tpu.memory_space<vmem>>, vector<256x1xf32>
    %4 = vector.broadcast %2 : vector<256x1xf32> to vector<256x512xf32>
    %5 = vector.broadcast %0 : vector<1x512xf32> to vector<256x512xf32>
    %6 = arith.subf %4, %5 : vector<256x512xf32>
    %7 = vector.broadcast %3 : vector<256x1xf32> to vector<256x512xf32>
    %8 = vector.broadcast %1 : vector<1x512xf32> to vector<256x512xf32>
    %9 = arith.subf %7, %8 : vector<256x512xf32>
    %10 = arith.mulf %6, %6 : vector<256x512xf32>
    %11 = arith.mulf %9, %9 : vector<256x512xf32>
    %12 = arith.addf %10, %11 : vector<256x512xf32>
    %c0_i32 = arith.constant 0 : i32
    %13 = arith.cmpi eq, %arg1, %c0_i32 : i32
    %14 = arith.extui %13 : i1 to i32
    %c0_i32_6 = arith.constant 0 : i32
    %15 = arith.cmpi ne, %14, %c0_i32_6 : i32
    scf.if %15 {
      %c0_10 = arith.constant 0 : index
      %c0_11 = arith.constant 0 : index
      %22 = vector.load %arg5[%c0_10, %c0_11] : memref<256x512xf32, #tpu.memory_space<vmem>>, vector<256x512xf32>
      tpu.vector_store %arg5[%c0_10, %c0_11], %12 {strides = array<i32>} : memref<256x512xf32, #tpu.memory_space<vmem>>, vector<256x512xf32>,
    } else {
    }
    %c0_i32_7 = arith.constant 0 : i32
    %16 = arith.cmpi sgt, %arg1, %c0_i32_7 : i32
    %17 = arith.extui %16 : i1 to i32
    %c0_i32_8 = arith.constant 0 : i32
    %18 = arith.cmpi ne, %17, %c0_i32_8 : i32
    scf.if %18 {
      %c0_10 = arith.constant 0 : index
      %c0_11 = arith.constant 0 : index
      %22 = vector.load %arg5[%c0_10, %c0_11] : memref<256x512xf32, #tpu.memory_space<vmem>>, vector<256x512xf32>
      %23 = arith.minimumf %22, %12 : vector<256x512xf32>
      %c0_12 = arith.constant 0 : index
      %c0_13 = arith.constant 0 : index
      %24 = vector.load %arg5[%c0_12, %c0_13] : memref<256x512xf32, #tpu.memory_space<vmem>>, vector<256x512xf32>
      tpu.vector_store %arg5[%c0_12, %c0_13], %23 {strides = array<i32>} : memref<256x512xf32, #tpu.memory_space<vmem>>, vector<256x512xf32>,
    } else {
    }
    %c1_i32 = arith.constant 1 : i32
    %19 = arith.cmpi eq, %arg1, %c1_i32 : i32
    %20 = arith.extui %19 : i1 to i32
    %c0_i32_9 = arith.constant 0 : i32
    %21 = arith.cmpi ne, %20, %c0_i32_9 : i32
    scf.if %21 {
      %c0_10 = arith.constant 0 : index
      %c0_11 = arith.constant 0 : index
      %22 = vector.load %arg5[%c0_10, %c0_11] : memref<256x512xf32, #tpu.memory_space<vmem>>, vector<256x512xf32>
      %cst = arith.constant dense<0x7F800000> : vector<512xf32>
      %23 = vector.multi_reduction <minimumf>, %22, %cst [0] : vector<256x512xf32> to vector<512xf32>
      %24 = vector.shape_cast %23 : vector<512xf32> to vector<1x512xf32>
      %25 = math.sqrt %24 : vector<1x512xf32>
      %26 = vector.shape_cast %25 : vector<1x512xf32> to vector<1x1x512xf32>
      %c0_12 = arith.constant 0 : index
      %c0_13 = arith.constant 0 : index
      %c0_14 = arith.constant 0 : index
      %27 = vector.load %arg4[%c0_12, %c0_13, %c0_14] : memref<1x1x512xf32, #tpu.memory_space<vmem>>, vector<1x1x512xf32>
      tpu.vector_store %arg4[%c0_12, %c0_13, %c0_14], %26 {strides = array<i32>} : memref<1x1x512xf32, #tpu.memory_space<vmem>>, vector<1x1x512xf32>,
    } else {
    }
    return
  }
  func.func @transform_0(%arg0: i32, %arg1: i32) -> (i32, i32) {
    %c0_i32 = arith.constant 0 : i32
    %c0_i32_0 = arith.constant 0 : i32
    return %c0_i32, %arg0 : i32, i32
  }
  func.func @transform_1(%arg0: i32, %arg1: i32) -> (i32, i32) {
    %c0_i32 = arith.constant 0 : i32
    %c0_i32_0 = arith.constant 0 : i32
    return %arg1, %c0_i32 : i32, i32
  }
  func.func @transform_2(%arg0: i32, %arg1: i32) -> (i32, i32, i32) {
    %c0_i32 = arith.constant 0 : i32
    %c0_i32_0 = arith.constant 0 : i32
    %c0_i32_1 = arith.constant 0 : i32
    return %arg0, %c0_i32, %c0_i32_0 : i32, i32, i32
  }
}

</mosaic_0001>

<llo_original>
// kernel: tpu_custom_call.1
$region0: #{tpu_custom_call.1}
  #allocation0 [shape = 'u32[]', space=smem, size = 0x4, offset = 0x4, fixed_abs, tag = 'smem constant byte address 0x4 - core index']
  #allocation1 [shape = 'u32[144,128]{1,0:T(1,128)}', space=vmem, size = 0x12000, scoped, tag = 'internal scratch']
  #allocation2 [shape = 'f32[256,512]{1,0:T(8,128)}', space=vmem, size = 0x80000, scoped, tag = 'scratch operand']
  %s0 = inlined_call_operand.vmem [shape: f32[2,1024], index: 0, kind: input, shape index: {}]
  %s1 = inlined_call_operand.vmem [shape: f32[512,2], index: 1, kind: input, shape index: {}]
  %s2 = inlined_call_operand.hbm [shape: f32[2,1,512], index: 2, kind: output, shape index: {}]
  %s3 = sld [smem:[#allocation0]]
  $region53: #{tpu_custom_call.1} parent=0
    _
  %s5 = ssub.s32 1, %s3
  %s6 = scalar_select 0, %s5, %s3
  $region1: #{tpu_custom_call.1} parent=0
    #allocation3 [shape = 'u8[4096]{0}', space=vmem, size = 0x1000, scoped, tag = 'output window, operand 0']
    #allocation4 [shape = 's32[2]{0}', space=sflag, size = 0x8, scoped, tag = 'scoped memory for tpu_custom_call.1']
    %7 = vsyncpa [#allocation4], 0
    %s8 = scalar_lea.sflag [#allocation4], 1
    %9 = vsyncpa %s8, 0
    loop: start=0, step=1, limit=6
    $region2: #{tpu_custom_call.1} parent=1 // loop_pre_header
      _
    $region3: #{tpu_custom_call.1} parent=1 // loop_header
      %s11 = sphi 0, %s15
      %p12 = scmp.ge.s32.totalorder %s11, 6
      %s18 = sphi 0, %s30
      %s19 = sphi 0, %s26
      %s20 = sphi 0, %s18
      %s21 = sphi 0, %s19
      %s22 = sphi 0, %s20
      %s23 = sphi 0, %s21
      %s33 = sphi 0, %s35
      %s36 = sphi 0, %s33
      %s37 = sphi 0, %s36
      %s53 = sphi 0, %s37
      %s59 = sphi 0, %s61
      %s62 = sphi 0, %s59
      %s63 = sphi 0, %s62
      %s79 = sphi 0, %s63
      %s85 = sphi 0, %s87
      %s88 = sphi 0, %s85
      %s89 = sphi 0, %s88
      %s105 = sphi 0, %s89
    $region4: #{tpu_custom_call.1} parent=1 // loop_header_branch
      %14 = sbr.rel (%p12) target = $region8
    $region5: #{tpu_custom_call.1} parent=1 // loop_body
      %s16 = ssub.s32 %s11, 1
      %s17 = ssub.s32 %s11, 2
      %s24 = sadd.s32 1, %s19
      %p25 = scmp.ge.s32.totalorder %s24, 2
      %s26 = scalar_select %p25, 0, %s24
      %s27 = sadd.s32 1, %s18
      %s28 = scalar_select %p25, %s27, %s18
      %p29 = scmp.ge.s32.totalorder %s28, 2
      %s30 = scalar_select %p29, 0, %s28
      %s31 = ssub.s32 %s18, %s30
      %p32 = scmp.eq.s32.totalorder %s31, 0
      %s34 = sadd.s32 %s33, 1
      %s35 = scalar_select %p32, %s33, %s34
      %p38 = pneg %p32
      %p39 = scmp.eq.s32.totalorder %s11, 3
      %p40 = por %p38, %p39
      %p41 = scmp.ne.s32.totalorder %s33, %s36
      %p42 = scmp.eq.s32.totalorder %s11, 0
      %p43 = por %p41, %p42
      %p44 = scmp.ne.s32.totalorder %s33, %s36
      %p45 = scmp.eq.s32.totalorder %s16, 3
      %p46 = por %p44, %p45
      %p47 = scmp.ne.s32.totalorder %s36, %s37
      %p48 = scmp.eq.s32.totalorder %s16, 0
      %p49 = por %p47, %p48
      %p50 = scmp.ne.s32.totalorder %s36, %s37
      %p51 = scmp.eq.s32.totalorder %s17, 3
      %p52 = por %p50, %p51
      %p54 = scmp.ne.s32.totalorder %s37, %s53
      %p55 = scmp.eq.s32.totalorder %s17, 0
      %p56 = por %p54, %p55
      %s57 = ssub.s32 %s19, %s26
      %p58 = scmp.eq.s32.totalorder %s57, 0
      %s60 = sadd.s32 %s59, 1
      %s61 = scalar_select %p58, %s59, %s60
      %p64 = pneg %p58
      %p65 = scmp.eq.s32.totalorder %s11, 3
      %p66 = por %p64, %p65
      %p67 = scmp.ne.s32.totalorder %s59, %s62
      %p68 = scmp.eq.s32.totalorder %s11, 0
      %p69 = por %p67, %p68
      %p70 = scmp.ne.s32.totalorder %s59, %s62
      %p71 = scmp.eq.s32.totalorder %s16, 3
      %p72 = por %p70, %p71
      %p73 = scmp.ne.s32.totalorder %s62, %s63
      %p74 = scmp.eq.s32.totalorder %s16, 0
      %p75 = por %p73, %p74
      %p76 = scmp.ne.s32.totalorder %s62, %s63
      %p77 = scmp.eq.s32.totalorder %s17, 3
      %p78 = por %p76, %p77
      %p80 = scmp.ne.s32.totalorder %s63, %s79
      %p81 = scmp.eq.s32.totalorder %s17, 0
      %p82 = por %p80, %p81
      %s83 = ssub.s32 %s18, %s30
      %p84 = scmp.eq.s32.totalorder %s83, 0
      %s86 = sadd.s32 %s85, 1
      %s87 = scalar_select %p84, %s85, %s86
      %p90 = pneg %p84
      %p91 = scmp.eq.s32.totalorder %s11, 3
      %p92 = por %p90, %p91
      %p93 = scmp.ne.s32.totalorder %s85, %s88
      %p94 = scmp.eq.s32.totalorder %s11, 0
      %p95 = por %p93, %p94
      %p96 = scmp.ne.s32.totalorder %s85, %s88
      %p97 = scmp.eq.s32.totalorder %s16, 3
      %p98 = por %p96, %p97
      %p99 = scmp.ne.s32.totalorder %s88, %s89
      %p100 = scmp.eq.s32.totalorder %s16, 0
      %p101 = por %p99, %p100
      %p102 = scmp.ne.s32.totalorder %s88, %s89
      %p103 = scmp.eq.s32.totalorder %s17, 3
      %p104 = por %p102, %p103
      %p106 = scmp.ne.s32.totalorder %s89, %s105
      %p107 = scmp.eq.s32.totalorder %s17, 0
      %p108 = por %p106, %p107
      %p109 = scmp.le.s32.totalorder 1, %s11
      %p110 = scmp.lt.s32.totalorder %s11, 5
      %p111 = pnand %p109, %p110
      %p112 = pneg %p111
      // Predicated region
      $region9: #{tpu_custom_call.1} parent=5 // pred_check
        _
      $region10: #{tpu_custom_call.1} parent=5 // pred_check_branch
        %114 = sbr.rel (%p111) target = $region12
      $region11: #{tpu_custom_call.1} parent=5 // pred_region
        %s115 = ssub.s32 %s11, 1
      $region12: #{tpu_custom_call.1} parent=5 // pred_fallthru
        _
      %p116 = scmp.lt.s32.totalorder %s11, 4
      // Predicated region
      $region13: #{tpu_custom_call.1} parent=5 // pred_check
        %p117 = pneg %p116
      $region14: #{tpu_custom_call.1} parent=5 // pred_check_branch
        %119 = sbr.rel (%p117) target = $region16
      $region15: #{tpu_custom_call.1} parent=5 // pred_region
        // Predicated region
        $region17: #{tpu_custom_call.1} parent=15 // pred_check
          %p120 = pneg %p43
        $region18: #{tpu_custom_call.1} parent=15 // pred_check_branch
          %122 = sbr.rel (%p120) target = $region20
        $region19: #{tpu_custom_call.1} parent=15 // pred_region
          %s123 = smul.u32 4, %s18
          %p124 = scmp.lt.s32.totalorder %s123, 7
          %s125 = scalar_select %p124, %s123, 7
          %s126 = smul.addr %s125, 2
          %s127 = scalar_lea.vmem %s0, %s126
          %s128 = smul.u32 4, %s18
        $region20: #{tpu_custom_call.1} parent=15 // pred_fallthru
          _
        // Predicated region
        $region21: #{tpu_custom_call.1} parent=15 // pred_check
          %p129 = pneg %p69
        $region22: #{tpu_custom_call.1} parent=15 // pred_check_branch
          %131 = sbr.rel (%p129) target = $region24
        $region23: #{tpu_custom_call.1} parent=15 // pred_region
          %s132 = smul.u32 32, %s19
          %p133 = scmp.lt.s32.totalorder %s132, 63
          %s134 = scalar_select %p133, %s132, 63
          %s135 = smul.addr %s134, 8
          %s136 = scalar_lea.vmem %s1, %s135
          %s137 = smul.u32 32, %s19
        $region24: #{tpu_custom_call.1} parent=15 // pred_fallthru
          _
      $region16: #{tpu_custom_call.1} parent=5 // pred_fallthru
        _
      %p138 = scmp.le.s32.totalorder 1, %s11
      %p139 = scmp.lt.s32.totalorder %s11, 5
      %p140 = pnand %p138, %p139
      %p141 = pneg %p140
      // Predicated region
      $region25: #{tpu_custom_call.1} parent=5 // pred_check
        _
      $region26: #{tpu_custom_call.1} parent=5 // pred_check_branch
        %143 = sbr.rel (%p140) target = $region28
      $region27: #{tpu_custom_call.1} parent=5 // pred_region
        %s144 = ssub.s32 %s11, 1
        %s145 = smul.u32 4, %s20
        %p146 = scmp.lt.s32.totalorder %s145, 7
        %s147 = scalar_select %p146, %s145, 7
        %s148 = smul.addr %s147, 2
        %s149 = scalar_lea.vmem %s0, %s148
        %p150 = pneg %p49
        %p151 = pneg %p46
        %s152 = smul.u32 32, %s21
        %p153 = scmp.lt.s32.totalorder %s152, 63
        %s154 = scalar_select %p153, %s152, 63
        %s155 = smul.addr %s154, 8
        %s156 = scalar_lea.vmem %s1, %s155
        %p157 = pneg %p75
        %p158 = pneg %p72
        %p159 = pneg %p101
        %p160 = pneg %p98
        %s161 = sand.u32 %s88, 1
        %s162 = scalar_lea.sflag [#allocation4], %s161
        %s163 = sand.u32 %s88, 1
        %s164 = smul.addr %s163, 4
        %s165 = scalar_lea.vmem [#allocation3], %s164
        %s166 = smul.u32 4, %s20
        %p167 = scmp.lt.s32.totalorder %s166, 7
        %s168 = scalar_select %p167, %s166, 7
        %s169 = smul.addr %s168, 2
        %s170 = scalar_lea.vmem %s0, %s169
        %s171 = smul.u32 4, %s20
        %s172 = smul.u32 32, %s21
        %p173 = scmp.lt.s32.totalorder %s172, 63
        %s174 = scalar_select %p173, %s172, 63
        %s175 = smul.addr %s174, 8
        %s176 = scalar_lea.vmem %s1, %s175
        %s177 = smul.u32 32, %s21
        %v178 = vld [vmem:[%s170] ss:$2 sm:$0xf]
        %s179 = scalar_lea.vmem %s170, 1
        %v180 = vld [vmem:[%s179] ss:$2 sm:$0xf]
        %v181 = vld [vmem:[%s176] sm:$0xff]
        %v182 = vld [vmem:[%s176 + $0x8] sm:$0xff]
        %v183 = vld [vmem:[%s176 + $0x10] sm:$0xff]
        %v184 = vld [vmem:[%s176 + $0x18] sm:$0xff]
        %v185 = vld [vmem:[%s176 + $0x20] sm:$0xff]
        %v186 = vld [vmem:[%s176 + $0x28] sm:$0xff]
        %v187 = vld [vmem:[%s176 + $0x30] sm:$0xff]
        %v188 = vld [vmem:[%s176 + $0x38] sm:$0xff]
        %v189 = vld [vmem:[%s176 + $0x40] sm:$0xff]
        %v190 = vld [vmem:[%s176 + $0x48] sm:$0xff]
        %v191 = vld [vmem:[%s176 + $0x50] sm:$0xff]
        %v192 = vld [vmem:[%s176 + $0x58] sm:$0xff]
        %v193 = vld [vmem:[%s176 + $0x60] sm:$0xff]
        %v194 = vld [vmem:[%s176 + $0x68] sm:$0xff]
        %v195 = vld [vmem:[%s176 + $0x70] sm:$0xff]
        %v196 = vld [vmem:[%s176 + $0x78] sm:$0xff]
        %v197 = vld [vmem:[%s176 + $0x80] sm:$0xff]
        %v198 = vld [vmem:[%s176 + $0x88] sm:$0xff]
        %v199 = vld [vmem:[%s176 + $0x90] sm:$0xff]
        %v200 = vld [vmem:[%s176 + $0x98] sm:$0xff]
        %v201 = vld [vmem:[%s176 + $0xa0] sm:$0xff]
        %v202 = vld [vmem:[%s176 + $0xa8] sm:$0xff]
        %v203 = vld [vmem:[%s176 + $0xb0] sm:$0xff]
        %v204 = vld [vmem:[%s176 + $0xb8] sm:$0xff]
        %v205 = vld [vmem:[%s176 + $0xc0] sm:$0xff]
        %v206 = vld [vmem:[%s176 + $0xc8] sm:$0xff]
        %v207 = vld [vmem:[%s176 + $0xd0] sm:$0xff]
        %v208 = vld [vmem:[%s176 + $0xd8] sm:$0xff]
        %v209 = vld [vmem:[%s176 + $0xe0] sm:$0xff]
        %v210 = vld [vmem:[%s176 + $0xe8] sm:$0xff]
        %v211 = vld [vmem:[%s176 + $0xf0] sm:$0xff]
        %v212 = vld [vmem:[%s176 + $0xf8] sm:$0xff]
        %214 = vset.pattern.permute.xlu0 0
        %215 = vperm.xlu0 %214, %v181
        %v216 = vpop.permute.xlu0 %215
        %219 = vset.pattern.permute.xlu0 0
        %220 = vperm.xlu0 %219, %v182
        %v221 = vpop.permute.xlu0 %220
        %224 = vset.pattern.permute.xlu0 0
        %225 = vperm.xlu0 %224, %v183
        %v226 = vpop.permute.xlu0 %225
        %229 = vset.pattern.permute.xlu0 0
        %230 = vperm.xlu0 %229, %v184
        %v231 = vpop.permute.xlu0 %230
        %234 = vset.pattern.permute.xlu0 0
        %235 = vperm.xlu0 %234, %v185
        %v236 = vpop.permute.xlu0 %235
        %239 = vset.pattern.permute.xlu0 0
        %240 = vperm.xlu0 %239, %v186
        %v241 = vpop.permute.xlu0 %240
        %244 = vset.pattern.permute.xlu0 0
        %245 = vperm.xlu0 %244, %v187
        %v246 = vpop.permute.xlu0 %245
        %249 = vset.pattern.permute.xlu0 0
        %250 = vperm.xlu0 %249, %v188
        %v251 = vpop.permute.xlu0 %250
        %254 = vset.pattern.permute.xlu0 0
        %255 = vperm.xlu0 %254, %v189
        %v256 = vpop.permute.xlu0 %255
        %259 = vset.pattern.permute.xlu0 0
        %260 = vperm.xlu0 %259, %v190
        %v261 = vpop.permute.xlu0 %260
        %264 = vset.pattern.permute.xlu0 0
        %265 = vperm.xlu0 %264, %v191
        %v266 = vpop.permute.xlu0 %265
        %269 = vset.pattern.permute.xlu0 0
        %270 = vperm.xlu0 %269, %v192
        %v271 = vpop.permute.xlu0 %270
        %274 = vset.pattern.permute.xlu0 0
        %275 = vperm.xlu0 %274, %v193
        %v276 = vpop.permute.xlu0 %275
        %279 = vset.pattern.permute.xlu0 0
        %280 = vperm.xlu0 %279, %v194
        %v281 = vpop.permute.xlu0 %280
        %284 = vset.pattern.permute.xlu0 0
        %285 = vperm.xlu0 %284, %v195
        %v286 = vpop.permute.xlu0 %285
        %289 = vset.pattern.permute.xlu0 0
        %290 = vperm.xlu0 %289, %v196
        %v291 = vpop.permute.xlu0 %290
        %294 = vset.pattern.permute.xlu0 0
        %295 = vperm.xlu0 %294, %v197
        %v296 = vpop.permute.xlu0 %295
        %299 = vset.pattern.permute.xlu0 0
        %300 = vperm.xlu0 %299, %v198
        %v301 = vpop.permute.xlu0 %300
        %304 = vset.pattern.permute.xlu0 0
        %305 = vperm.xlu0 %304, %v199
        %v306 = vpop.permute.xlu0 %305
        %309 = vset.pattern.permute.xlu0 0
        %310 = vperm.xlu0 %309, %v200
        %v311 = vpop.permute.xlu0 %310
        %314 = vset.pattern.permute.xlu0 0
        %315 = vperm.xlu0 %314, %v201
        %v316 = vpop.permute.xlu0 %315
        %319 = vset.pattern.permute.xlu0 0
        %320 = vperm.xlu0 %319, %v202
        %v321 = vpop.permute.xlu0 %320
        %324 = vset.pattern.permute.xlu0 0
        %325 = vperm.xlu0 %324, %v203
        %v326 = vpop.permute.xlu0 %325
        %329 = vset.pattern.permute.xlu0 0
        %330 = vperm.xlu0 %329, %v204
        %v331 = vpop.permute.xlu0 %330
        %334 = vset.pattern.permute.xlu0 0
        %335 = vperm.xlu0 %334, %v205
        %v336 = vpop.permute.xlu0 %335
        %339 = vset.pattern.permute.xlu0 0
        %340 = vperm.xlu0 %339, %v206
        %v341 = vpop.permute.xlu0 %340
        %344 = vset.pattern.permute.xlu0 0
        %345 = vperm.xlu0 %344, %v207
        %v346 = vpop.permute.xlu0 %345
        %349 = vset.pattern.permute.xlu0 0
        %350 = vperm.xlu0 %349, %v208
        %v351 = vpop.permute.xlu0 %350
        %354 = vset.pattern.permute.xlu0 0
        %355 = vperm.xlu0 %354, %v209
        %v356 = vpop.permute.xlu0 %355
        %359 = vset.pattern.permute.xlu0 0
        %360 = vperm.xlu0 %359, %v210
        %v361 = vpop.permute.xlu0 %360
        %364 = vset.pattern.permute.xlu0 0
        %365 = vperm.xlu0 %364, %v211
        %v366 = vpop.permute.xlu0 %365
        %369 = vset.pattern.permute.xlu0 0
        %370 = vperm.xlu0 %369, %v212
        %v371 = vpop.permute.xlu0 %370
        %v374 = vlaneseq
        %v375 = vshrl.u32 %v374, 7
        %v376 = vsub.s32 0, %v375
        %v377 = vrot.slane %v178, %v376
        %v378 = vlaneseq
        %v379 = vshrl.u32 %v378, 7
        %v380 = vsub.s32 1, %v379
        %v381 = vrot.slane %v178, %v380
        %v382 = vlaneseq
        %v383 = vshrl.u32 %v382, 7
        %v384 = vsub.s32 2, %v383
        %v385 = vrot.slane %v178, %v384
        %v386 = vlaneseq
        %v387 = vshrl.u32 %v386, 7
        %v388 = vsub.s32 3, %v387
        %v389 = vrot.slane %v178, %v388
        %v394 = vsub.f32 %v216, %v377
        %v395 = vsub.f32 %v216, %v381
        %v396 = vsub.f32 %v216, %v385
        %v397 = vsub.f32 %v216, %v389
        %v398 = vsub.f32 %v221, %v377
        %v399 = vsub.f32 %v221, %v381
        %v400 = vsub.f32 %v221, %v385
        %v401 = vsub.f32 %v221, %v389
        %v402 = vsub.f32 %v226, %v377
        %v403 = vsub.f32 %v226, %v381
        %v404 = vsub.f32 %v226, %v385
        %v405 = vsub.f32 %v226, %v389
        %v406 = vsub.f32 %v231, %v377
        %v407 = vsub.f32 %v231, %v381
        %v408 = vsub.f32 %v231, %v385
        %v409 = vsub.f32 %v231, %v389
        %v410 = vsub.f32 %v236, %v377
        %v411 = vsub.f32 %v236, %v381
        %v412 = vsub.f32 %v236, %v385
        %v413 = vsub.f32 %v236, %v389
        %v414 = vsub.f32 %v241, %v377
        %v415 = vsub.f32 %v241, %v381
        %v416 = vsub.f32 %v241, %v385
        %v417 = vsub.f32 %v241, %v389
        %v418 = vsub.f32 %v246, %v377
        %v419 = vsub.f32 %v246, %v381
        %v420 = vsub.f32 %v246, %v385
        %v421 = vsub.f32 %v246, %v389
        %v422 = vsub.f32 %v251, %v377
        %v423 = vsub.f32 %v251, %v381
        %v424 = vsub.f32 %v251, %v385
        %v425 = vsub.f32 %v251, %v389
        %v426 = vsub.f32 %v256, %v377
        %v427 = vsub.f32 %v256, %v381
        %v428 = vsub.f32 %v256, %v385
        %v429 = vsub.f32 %v256, %v389
        %v430 = vsub.f32 %v261, %v377
        %v431 = vsub.f32 %v261, %v381
        %v432 = vsub.f32 %v261, %v385
        %v433 = vsub.f32 %v261, %v389
        %v434 = vsub.f32 %v266, %v377
        %v435 = vsub.f32 %v266, %v381
        %v436 = vsub.f32 %v266, %v385
        %v437 = vsub.f32 %v266, %v389
        %v438 = vsub.f32 %v271, %v377
        %v439 = vsub.f32 %v271, %v381
        %v440 = vsub.f32 %v271, %v385
        %v441 = vsub.f32 %v271, %v389
        %v442 = vsub.f32 %v276, %v377
        %v443 = vsub.f32 %v276, %v381
        %v444 = vsub.f32 %v276, %v385
        %v445 = vsub.f32 %v276, %v389
        %v446 = vsub.f32 %v281, %v377
        %v447 = vsub.f32 %v281, %v381
        %v448 = vsub.f32 %v281, %v385
        %v449 = vsub.f32 %v281, %v389
        %v450 = vsub.f32 %v286, %v377
        %v451 = vsub.f32 %v286, %v381
        %v452 = vsub.f32 %v286, %v385
        %v453 = vsub.f32 %v286, %v389
        %v454 = vsub.f32 %v291, %v377
        %v455 = vsub.f32 %v291, %v381
        %v456 = vsub.f32 %v291, %v385
        %v457 = vsub.f32 %v291, %v389
        %v458 = vsub.f32 %v296, %v377
        %v459 = vsub.f32 %v296, %v381
        %v460 = vsub.f32 %v296, %v385
        %v461 = vsub.f32 %v296, %v389
        %v462 = vsub.f32 %v301, %v377
        %v463 = vsub.f32 %v301, %v381
        %v464 = vsub.f32 %v301, %v385
        %v465 = vsub.f32 %v301, %v389
        %v466 = vsub.f32 %v306, %v377
        %v467 = vsub.f32 %v306, %v381
        %v468 = vsub.f32 %v306, %v385
        %v469 = vsub.f32 %v306, %v389
        %v470 = vsub.f32 %v311, %v377
        %v471 = vsub.f32 %v311, %v381
        %v472 = vsub.f32 %v311, %v385
        %v473 = vsub.f32 %v311, %v389
        %v474 = vsub.f32 %v316, %v377
        %v475 = vsub.f32 %v316, %v381
        %v476 = vsub.f32 %v316, %v385
        %v477 = vsub.f32 %v316, %v389
        %v478 = vsub.f32 %v321, %v377
        %v479 = vsub.f32 %v321, %v381
        %v480 = vsub.f32 %v321, %v385
        %v481 = vsub.f32 %v321, %v389
        %v482 = vsub.f32 %v326, %v377
        %v483 = vsub.f32 %v326, %v381
        %v484 = vsub.f32 %v326, %v385
        %v485 = vsub.f32 %v326, %v389
        %v486 = vsub.f32 %v331, %v377
        %v487 = vsub.f32 %v331, %v381
        %v488 = vsub.f32 %v331, %v385
        %v489 = vsub.f32 %v331, %v389
        %v490 = vsub.f32 %v336, %v377
        %v491 = vsub.f32 %v336, %v381
        %v492 = vsub.f32 %v336, %v385
        %v493 = vsub.f32 %v336, %v389
        %v494 = vsub.f32 %v341, %v377
        %v495 = vsub.f32 %v341, %v381
        %v496 = vsub.f32 %v341, %v385
        %v497 = vsub.f32 %v341, %v389
        %v498 = vsub.f32 %v346, %v377
        %v499 = vsub.f32 %v346, %v381
        %v500 = vsub.f32 %v346, %v385
        %v501 = vsub.f32 %v346, %v389
        %v502 = vsub.f32 %v351, %v377
        %v503 = vsub.f32 %v351, %v381
        %v504 = vsub.f32 %v351, %v385
        %v505 = vsub.f32 %v351, %v389
        %v506 = vsub.f32 %v356, %v377
        %v507 = vsub.f32 %v356, %v381
        %v508 = vsub.f32 %v356, %v385
        %v509 = vsub.f32 %v356, %v389
        %v510 = vsub.f32 %v361, %v377
        %v511 = vsub.f32 %v361, %v381
        %v512 = vsub.f32 %v361, %v385
        %v513 = vsub.f32 %v361, %v389
        %v514 = vsub.f32 %v366, %v377
        %v515 = vsub.f32 %v366, %v381
        %v516 = vsub.f32 %v366, %v385
        %v517 = vsub.f32 %v366, %v389
        %v518 = vsub.f32 %v371, %v377
        %v519 = vsub.f32 %v371, %v381
        %v520 = vsub.f32 %v371, %v385
        %v521 = vsub.f32 %v371, %v389
        %522 = vset.pattern.permute.xlu0 1
        %523 = vperm.xlu0 %522, %v181
        %v524 = vpop.permute.xlu0 %523
        %526 = vset.pattern.permute.xlu0 1
        %527 = vperm.xlu0 %526, %v182
        %v528 = vpop.permute.xlu0 %527
        %530 = vset.pattern.permute.xlu0 1
        %531 = vperm.xlu0 %530, %v183
        %v532 = vpop.permute.xlu0 %531
        %534 = vset.pattern.permute.xlu0 1
        %535 = vperm.xlu0 %534, %v184
        %v536 = vpop.permute.xlu0 %535
        %538 = vset.pattern.permute.xlu0 1
        %539 = vperm.xlu0 %538, %v185
        %v540 = vpop.permute.xlu0 %539
        %542 = vset.pattern.permute.xlu0 1
        %543 = vperm.xlu0 %542, %v186
        %v544 = vpop.permute.xlu0 %543
        %546 = vset.pattern.permute.xlu0 1
        %547 = vperm.xlu0 %546, %v187
        %v548 = vpop.permute.xlu0 %547
        %550 = vset.pattern.permute.xlu0 1
        %551 = vperm.xlu0 %550, %v188
        %v552 = vpop.permute.xlu0 %551
        %554 = vset.pattern.permute.xlu0 1
        %555 = vperm.xlu0 %554, %v189
        %v556 = vpop.permute.xlu0 %555
        %558 = vset.pattern.permute.xlu0 1
        %559 = vperm.xlu0 %558, %v190
        %v560 = vpop.permute.xlu0 %559
        %562 = vset.pattern.permute.xlu0 1
        %563 = vperm.xlu0 %562, %v191
        %v564 = vpop.permute.xlu0 %563
        %566 = vset.pattern.permute.xlu0 1
        %567 = vperm.xlu0 %566, %v192
        %v568 = vpop.permute.xlu0 %567
        %570 = vset.pattern.permute.xlu0 1
        %571 = vperm.xlu0 %570, %v193
        %v572 = vpop.permute.xlu0 %571
        %574 = vset.pattern.permute.xlu0 1
        %575 = vperm.xlu0 %574, %v194
        %v576 = vpop.permute.xlu0 %575
        %578 = vset.pattern.permute.xlu0 1
        %579 = vperm.xlu0 %578, %v195
        %v580 = vpop.permute.xlu0 %579
        %582 = vset.pattern.permute.xlu0 1
        %583 = vperm.xlu0 %582, %v196
        %v584 = vpop.permute.xlu0 %583
        %586 = vset.pattern.permute.xlu0 1
        %587 = vperm.xlu0 %586, %v197
        %v588 = vpop.permute.xlu0 %587
        %590 = vset.pattern.permute.xlu0 1
        %591 = vperm.xlu0 %590, %v198
        %v592 = vpop.permute.xlu0 %591
        %594 = vset.pattern.permute.xlu0 1
        %595 = vperm.xlu0 %594, %v199
        %v596 = vpop.permute.xlu0 %595
        %598 = vset.pattern.permute.xlu0 1
        %599 = vperm.xlu0 %598, %v200
        %v600 = vpop.permute.xlu0 %599
        %602 = vset.pattern.permute.xlu0 1
        %603 = vperm.xlu0 %602, %v201
        %v604 = vpop.permute.xlu0 %603
        %606 = vset.pattern.permute.xlu0 1
        %607 = vperm.xlu0 %606, %v202
        %v608 = vpop.permute.xlu0 %607
        %610 = vset.pattern.permute.xlu0 1
        %611 = vperm.xlu0 %610, %v203
        %v612 = vpop.permute.xlu0 %611
        %614 = vset.pattern.permute.xlu0 1
        %615 = vperm.xlu0 %614, %v204
        %v616 = vpop.permute.xlu0 %615
        %618 = vset.pattern.permute.xlu0 1
        %619 = vperm.xlu0 %618, %v205
        %v620 = vpop.permute.xlu0 %619
        %622 = vset.pattern.permute.xlu0 1
        %623 = vperm.xlu0 %622, %v206
        %v624 = vpop.permute.xlu0 %623
        %626 = vset.pattern.permute.xlu0 1
        %627 = vperm.xlu0 %626, %v207
        %v628 = vpop.permute.xlu0 %627
        %630 = vset.pattern.permute.xlu0 1
        %631 = vperm.xlu0 %630, %v208
        %v632 = vpop.permute.xlu0 %631
        %634 = vset.pattern.permute.xlu0 1
        %635 = vperm.xlu0 %634, %v209
        %v636 = vpop.permute.xlu0 %635
        %638 = vset.pattern.permute.xlu0 1
        %639 = vperm.xlu0 %638, %v210
        %v640 = vpop.permute.xlu0 %639
        %642 = vset.pattern.permute.xlu0 1
        %643 = vperm.xlu0 %642, %v211
        %v644 = vpop.permute.xlu0 %643
        %646 = vset.pattern.permute.xlu0 1
        %647 = vperm.xlu0 %646, %v212
        %v648 = vpop.permute.xlu0 %647
        %v651 = vlaneseq
        %v652 = vshrl.u32 %v651, 7
        %v653 = vsub.s32 0, %v652
        %v654 = vrot.slane %v180, %v653
        %v655 = vlaneseq
        %v656 = vshrl.u32 %v655, 7
        %v657 = vsub.s32 1, %v656
        %v658 = vrot.slane %v180, %v657
        %v659 = vlaneseq
        %v660 = vshrl.u32 %v659, 7
        %v661 = vsub.s32 2, %v660
        %v662 = vrot.slane %v180, %v661
        %v663 = vlaneseq
        %v664 = vshrl.u32 %v663, 7
        %v665 = vsub.s32 3, %v664
        %v666 = vrot.slane %v180, %v665
        %v671 = vsub.f32 %v524, %v654
        %v672 = vsub.f32 %v524, %v658
        %v673 = vsub.f32 %v524, %v662
        %v674 = vsub.f32 %v524, %v666
        %v675 = vsub.f32 %v528, %v654
        %v676 = vsub.f32 %v528, %v658
        %v677 = vsub.f32 %v528, %v662
        %v678 = vsub.f32 %v528, %v666
        %v679 = vsub.f32 %v532, %v654
        %v680 = vsub.f32 %v532, %v658
        %v681 = vsub.f32 %v532, %v662
        %v682 = vsub.f32 %v532, %v666
        %v683 = vsub.f32 %v536, %v654
        %v684 = vsub.f32 %v536, %v658
        %v685 = vsub.f32 %v536, %v662
        %v686 = vsub.f32 %v536, %v666
        %v687 = vsub.f32 %v540, %v654
        %v688 = vsub.f32 %v540, %v658
        %v689 = vsub.f32 %v540, %v662
        %v690 = vsub.f32 %v540, %v666
        %v691 = vsub.f32 %v544, %v654
        %v692 = vsub.f32 %v544, %v658
        %v693 = vsub.f32 %v544, %v662
        %v694 = vsub.f32 %v544, %v666
        %v695 = vsub.f32 %v548, %v654
        %v696 = vsub.f32 %v548, %v658
        %v697 = vsub.f32 %v548, %v662
        %v698 = vsub.f32 %v548, %v666
        %v699 = vsub.f32 %v552, %v654
        %v700 = vsub.f32 %v552, %v658
        %v701 = vsub.f32 %v552, %v662
        %v702 = vsub.f32 %v552, %v666
        %v703 = vsub.f32 %v556, %v654
        %v704 = vsub.f32 %v556, %v658
        %v705 = vsub.f32 %v556, %v662
        %v706 = vsub.f32 %v556, %v666
        %v707 = vsub.f32 %v560, %v654
        %v708 = vsub.f32 %v560, %v658
        %v709 = vsub.f32 %v560, %v662
        %v710 = vsub.f32 %v560, %v666
        %v711 = vsub.f32 %v564, %v654
        %v712 = vsub.f32 %v564, %v658
        %v713 = vsub.f32 %v564, %v662
        %v714 = vsub.f32 %v564, %v666
        %v715 = vsub.f32 %v568, %v654
        %v716 = vsub.f32 %v568, %v658
        %v717 = vsub.f32 %v568, %v662
        %v718 = vsub.f32 %v568, %v666
        %v719 = vsub.f32 %v572, %v654
        %v720 = vsub.f32 %v572, %v658
        %v721 = vsub.f32 %v572, %v662
        %v722 = vsub.f32 %v572, %v666
        %v723 = vsub.f32 %v576, %v654
        %v724 = vsub.f32 %v576, %v658
        %v725 = vsub.f32 %v576, %v662
        %v726 = vsub.f32 %v576, %v666
        %v727 = vsub.f32 %v580, %v654
        %v728 = vsub.f32 %v580, %v658
        %v729 = vsub.f32 %v580, %v662
        %v730 = vsub.f32 %v580, %v666
        %v731 = vsub.f32 %v584, %v654
        %v732 = vsub.f32 %v584, %v658
        %v733 = vsub.f32 %v584, %v662
        %v734 = vsub.f32 %v584, %v666
        %v735 = vsub.f32 %v588, %v654
        %v736 = vsub.f32 %v588, %v658
        %v737 = vsub.f32 %v588, %v662
        %v738 = vsub.f32 %v588, %v666
        %v739 = vsub.f32 %v592, %v654
        %v740 = vsub.f32 %v592, %v658
        %v741 = vsub.f32 %v592, %v662
        %v742 = vsub.f32 %v592, %v666
        %v743 = vsub.f32 %v596, %v654
        %v744 = vsub.f32 %v596, %v658
        %v745 = vsub.f32 %v596, %v662
        %v746 = vsub.f32 %v596, %v666
        %v747 = vsub.f32 %v600, %v654
        %v748 = vsub.f32 %v600, %v658
        %v749 = vsub.f32 %v600, %v662
        %v750 = vsub.f32 %v600, %v666
        %v751 = vsub.f32 %v604, %v654
        %v752 = vsub.f32 %v604, %v658
        %v753 = vsub.f32 %v604, %v662
        %v754 = vsub.f32 %v604, %v666
        %v755 = vsub.f32 %v608, %v654
        %v756 = vsub.f32 %v608, %v658
        %v757 = vsub.f32 %v608, %v662
        %v758 = vsub.f32 %v608, %v666
        %v759 = vsub.f32 %v612, %v654
        %v760 = vsub.f32 %v612, %v658
        %v761 = vsub.f32 %v612, %v662
        %v762 = vsub.f32 %v612, %v666
        %v763 = vsub.f32 %v616, %v654
        %v764 = vsub.f32 %v616, %v658
        %v765 = vsub.f32 %v616, %v662
        %v766 = vsub.f32 %v616, %v666
        %v767 = vsub.f32 %v620, %v654
        %v768 = vsub.f32 %v620, %v658
        %v769 = vsub.f32 %v620, %v662
        %v770 = vsub.f32 %v620, %v666
        %v771 = vsub.f32 %v624, %v654
        %v772 = vsub.f32 %v624, %v658
        %v773 = vsub.f32 %v624, %v662
        %v774 = vsub.f32 %v624, %v666
        %v775 = vsub.f32 %v628, %v654
        %v776 = vsub.f32 %v628, %v658
        %v777 = vsub.f32 %v628, %v662
        %v778 = vsub.f32 %v628, %v666
        %v779 = vsub.f32 %v632, %v654
        %v780 = vsub.f32 %v632, %v658
        %v781 = vsub.f32 %v632, %v662
        %v782 = vsub.f32 %v632, %v666
        %v783 = vsub.f32 %v636, %v654
        %v784 = vsub.f32 %v636, %v658
        %v785 = vsub.f32 %v636, %v662
        %v786 = vsub.f32 %v636, %v666
        %v787 = vsub.f32 %v640, %v654
        %v788 = vsub.f32 %v640, %v658
        %v789 = vsub.f32 %v640, %v662
        %v790 = vsub.f32 %v640, %v666
        %v791 = vsub.f32 %v644, %v654
        %v792 = vsub.f32 %v644, %v658
        %v793 = vsub.f32 %v644, %v662
        %v794 = vsub.f32 %v644, %v666
        %v795 = vsub.f32 %v648, %v654
        %v796 = vsub.f32 %v648, %v658
        %v797 = vsub.f32 %v648, %v662
        %v798 = vsub.f32 %v648, %v666
        %v799 = vmul.f32 %v394, %v394
        %v800 = vmul.f32 %v395, %v395
        %v801 = vmul.f32 %v396, %v396
        %v802 = vmul.f32 %v397, %v397
        %v803 = vmul.f32 %v398, %v398
        %v804 = vmul.f32 %v399, %v399
        %v805 = vmul.f32 %v400, %v400
        %v806 = vmul.f32 %v401, %v401
        %v807 = vmul.f32 %v402, %v402
        %v808 = vmul.f32 %v403, %v403
        %v809 = vmul.f32 %v404, %v404
        %v810 = vmul.f32 %v405, %v405
        %v811 = vmul.f32 %v406, %v406
        %v812 = vmul.f32 %v407, %v407
        %v813 = vmul.f32 %v408, %v408
        %v814 = vmul.f32 %v409, %v409
        %v815 = vmul.f32 %v410, %v410
        %v816 = vmul.f32 %v411, %v411
        %v817 = vmul.f32 %v412, %v412
        %v818 = vmul.f32 %v413, %v413
        %v819 = vmul.f32 %v414, %v414
        %v820 = vmul.f32 %v415, %v415
        %v821 = vmul.f32 %v416, %v416
        %v822 = vmul.f32 %v417, %v417
        %v823 = vmul.f32 %v418, %v418
        %v824 = vmul.f32 %v419, %v419
        %v825 = vmul.f32 %v420, %v420
        %v826 = vmul.f32 %v421, %v421
        %v827 = vmul.f32 %v422, %v422
        %v828 = vmul.f32 %v423, %v423
        %v829 = vmul.f32 %v424, %v424
        %v830 = vmul.f32 %v425, %v425
        %v831 = vmul.f32 %v426, %v426
        %v832 = vmul.f32 %v427, %v427
        %v833 = vmul.f32 %v428, %v428
        %v834 = vmul.f32 %v429, %v429
        %v835 = vmul.f32 %v430, %v430
        %v836 = vmul.f32 %v431, %v431
        %v837 = vmul.f32 %v432, %v432
        %v838 = vmul.f32 %v433, %v433
        %v839 = vmul.f32 %v434, %v434
        %v840 = vmul.f32 %v435, %v435
        %v841 = vmul.f32 %v436, %v436
        %v842 = vmul.f32 %v437, %v437
        %v843 = vmul.f32 %v438, %v438
        %v844 = vmul.f32 %v439, %v439
        %v845 = vmul.f32 %v440, %v440
        %v846 = vmul.f32 %v441, %v441
        %v847 = vmul.f32 %v442, %v442
        %v848 = vmul.f32 %v443, %v443
        %v849 = vmul.f32 %v444, %v444
        %v850 = vmul.f32 %v445, %v445
        %v851 = vmul.f32 %v446, %v446
        %v852 = vmul.f32 %v447, %v447
        %v853 = vmul.f32 %v448, %v448
        %v854 = vmul.f32 %v449, %v449
        %v855 = vmul.f32 %v450, %v450
        %v856 = vmul.f32 %v451, %v451
        %v857 = vmul.f32 %v452, %v452
        %v858 = vmul.f32 %v453, %v453
        %v859 = vmul.f32 %v454, %v454
        %v860 = vmul.f32 %v455, %v455
        %v861 = vmul.f32 %v456, %v456
        %v862 = vmul.f32 %v457, %v457
        %v863 = vmul.f32 %v458, %v458
        %v864 = vmul.f32 %v459, %v459
        %v865 = vmul.f32 %v460, %v460
        %v866 = vmul.f32 %v461, %v461
        %v867 = vmul.f32 %v462, %v462
        %v868 = vmul.f32 %v463, %v463
        %v869 = vmul.f32 %v464, %v464
        %v870 = vmul.f32 %v465, %v465
        %v871 = vmul.f32 %v466, %v466
        %v872 = vmul.f32 %v467, %v467
        %v873 = vmul.f32 %v468, %v468
        %v874 = vmul.f32 %v469, %v469
        %v875 = vmul.f32 %v470, %v470
        %v876 = vmul.f32 %v471, %v471
        %v877 = vmul.f32 %v472, %v472
        %v878 = vmul.f32 %v473, %v473
        %v879 = vmul.f32 %v474, %v474
        %v880 = vmul.f32 %v475, %v475
        %v881 = vmul.f32 %v476, %v476
        %v882 = vmul.f32 %v477, %v477
        %v883 = vmul.f32 %v478, %v478
        %v884 = vmul.f32 %v479, %v479
        %v885 = vmul.f32 %v480, %v480
        %v886 = vmul.f32 %v481, %v481
        %v887 = vmul.f32 %v482, %v482
        %v888 = vmul.f32 %v483, %v483
        %v889 = vmul.f32 %v484, %v484
        %v890 = vmul.f32 %v485, %v485
        %v891 = vmul.f32 %v486, %v486
        %v892 = vmul.f32 %v487, %v487
        %v893 = vmul.f32 %v488, %v488
        %v894 = vmul.f32 %v489, %v489
        %v895 = vmul.f32 %v490, %v490
        %v896 = vmul.f32 %v491, %v491
        %v897 = vmul.f32 %v492, %v492
        %v898 = vmul.f32 %v493, %v493
        %v899 = vmul.f32 %v494, %v494
        %v900 = vmul.f32 %v495, %v495
        %v901 = vmul.f32 %v496, %v496
        %v902 = vmul.f32 %v497, %v497
        %v903 = vmul.f32 %v498, %v498
        %v904 = vmul.f32 %v499, %v499
        %v905 = vmul.f32 %v500, %v500
        %v906 = vmul.f32 %v501, %v501
        %v907 = vmul.f32 %v502, %v502
        %v908 = vmul.f32 %v503, %v503
        %v909 = vmul.f32 %v504, %v504
        %v910 = vmul.f32 %v505, %v505
        %v911 = vmul.f32 %v506, %v506
        %v912 = vmul.f32 %v507, %v507
        %v913 = vmul.f32 %v508, %v508
        %v914 = vmul.f32 %v509, %v509
        %v915 = vmul.f32 %v510, %v510
        %v916 = vmul.f32 %v511, %v511
        %v917 = vmul.f32 %v512, %v512
        %v918 = vmul.f32 %v513, %v513
        %v919 = vmul.f32 %v514, %v514
        %v920 = vmul.f32 %v515, %v515
        %v921 = vmul.f32 %v516, %v516
        %v922 = vmul.f32 %v517, %v517
        %v923 = vmul.f32 %v518, %v518
        %v924 = vmul.f32 %v519, %v519
        %v925 = vmul.f32 %v520, %v520
        %v926 = vmul.f32 %v521, %v521
        %v927 = vmul.f32 %v671, %v671
        %v928 = vmul.f32 %v672, %v672
        %v929 = vmul.f32 %v673, %v673
        %v930 = vmul.f32 %v674, %v674
        %v931 = vmul.f32 %v675, %v675
        %v932 = vmul.f32 %v676, %v676
        %v933 = vmul.f32 %v677, %v677
        %v934 = vmul.f32 %v678, %v678
        %v935 = vmul.f32 %v679, %v679
        %v936 = vmul.f32 %v680, %v680
        %v937 = vmul.f32 %v681, %v681
        %v938 = vmul.f32 %v682, %v682
        %v939 = vmul.f32 %v683, %v683
        %v940 = vmul.f32 %v684, %v684
        %v941 = vmul.f32 %v685, %v685
        %v942 = vmul.f32 %v686, %v686
        %v943 = vmul.f32 %v687, %v687
        %v944 = vmul.f32 %v688, %v688
        %v945 = vmul.f32 %v689, %v689
        %v946 = vmul.f32 %v690, %v690
        %v947 = vmul.f32 %v691, %v691
        %v948 = vmul.f32 %v692, %v692
        %v949 = vmul.f32 %v693, %v693
        %v950 = vmul.f32 %v694, %v694
        %v951 = vmul.f32 %v695, %v695
        %v952 = vmul.f32 %v696, %v696
        %v953 = vmul.f32 %v697, %v697
        %v954 = vmul.f32 %v698, %v698
        %v955 = vmul.f32 %v699, %v699
        %v956 = vmul.f32 %v700, %v700
        %v957 = vmul.f32 %v701, %v701
        %v958 = vmul.f32 %v702, %v702
        %v959 = vmul.f32 %v703, %v703
        %v960 = vmul.f32 %v704, %v704
        %v961 = vmul.f32 %v705, %v705
        %v962 = vmul.f32 %v706, %v706
        %v963 = vmul.f32 %v707, %v707
        %v964 = vmul.f32 %v708, %v708
        %v965 = vmul.f32 %v709, %v709
        %v966 = vmul.f32 %v710, %v710
        %v967 = vmul.f32 %v711, %v711
        %v968 = vmul.f32 %v712, %v712
        %v969 = vmul.f32 %v713, %v713
        %v970 = vmul.f32 %v714, %v714
        %v971 = vmul.f32 %v715, %v715
        %v972 = vmul.f32 %v716, %v716
        %v973 = vmul.f32 %v717, %v717
        %v974 = vmul.f32 %v718, %v718
        %v975 = vmul.f32 %v719, %v719
        %v976 = vmul.f32 %v720, %v720
        %v977 = vmul.f32 %v721, %v721
        %v978 = vmul.f32 %v722, %v722
        %v979 = vmul.f32 %v723, %v723
        %v980 = vmul.f32 %v724, %v724
        %v981 = vmul.f32 %v725, %v725
        %v982 = vmul.f32 %v726, %v726
        %v983 = vmul.f32 %v727, %v727
        %v984 = vmul.f32 %v728, %v728
        %v985 = vmul.f32 %v729, %v729
        %v986 = vmul.f32 %v730, %v730
        %v987 = vmul.f32 %v731, %v731
        %v988 = vmul.f32 %v732, %v732
        %v989 = vmul.f32 %v733, %v733
        %v990 = vmul.f32 %v734, %v734
        %v991 = vmul.f32 %v735, %v735
        %v992 = vmul.f32 %v736, %v736
        %v993 = vmul.f32 %v737, %v737
        %v994 = vmul.f32 %v738, %v738
        %v995 = vmul.f32 %v739, %v739
        %v996 = vmul.f32 %v740, %v740
        %v997 = vmul.f32 %v741, %v741
        %v998 = vmul.f32 %v742, %v742
        %v999 = vmul.f32 %v743, %v743
        %v1000 = vmul.f32 %v744, %v744
        %v1001 = vmul.f32 %v745, %v745
        %v1002 = vmul.f32 %v746, %v746
        %v1003 = vmul.f32 %v747, %v747
        %v1004 = vmul.f32 %v748, %v748
        %v1005 = vmul.f32 %v749, %v749
        %v1006 = vmul.f32 %v750, %v750
        %v1007 = vmul.f32 %v751, %v751
        %v1008 = vmul.f32 %v752, %v752
        %v1009 = vmul.f32 %v753, %v753
        %v1010 = vmul.f32 %v754, %v754
        %v1011 = vmul.f32 %v755, %v755
        %v1012 = vmul.f32 %v756, %v756
        %v1013 = vmul.f32 %v757, %v757
        %v1014 = vmul.f32 %v758, %v758
        %v1015 = vmul.f32 %v759, %v759
        %v1016 = vmul.f32 %v760, %v760
        %v1017 = vmul.f32 %v761, %v761
        %v1018 = vmul.f32 %v762, %v762
        %v1019 = vmul.f32 %v763, %v763
        %v1020 = vmul.f32 %v764, %v764
        %v1021 = vmul.f32 %v765, %v765
        %v1022 = vmul.f32 %v766, %v766
        %v1023 = vmul.f32 %v767, %v767
        %v1024 = vmul.f32 %v768, %v768
        %v1025 = vmul.f32 %v769, %v769
        %v1026 = vmul.f32 %v770, %v770
        %v1027 = vmul.f32 %v771, %v771
        %v1028 = vmul.f32 %v772, %v772
        %v1029 = vmul.f32 %v773, %v773
        %v1030 = vmul.f32 %v774, %v774
        %v1031 = vmul.f32 %v775, %v775
        %v1032 = vmul.f32 %v776, %v776
        %v1033 = vmul.f32 %v777, %v777
        %v1034 = vmul.f32 %v778, %v778
        %v1035 = vmul.f32 %v779, %v779
        %v1036 = vmul.f32 %v780, %v780
        %v1037 = vmul.f32 %v781, %v781
        %v1038 = vmul.f32 %v782, %v782
        %v1039 = vmul.f32 %v783, %v783
        %v1040 = vmul.f32 %v784, %v784
        %v1041 = vmul.f32 %v785, %v785
        %v1042 = vmul.f32 %v786, %v786
        %v1043 = vmul.f32 %v787, %v787
        %v1044 = vmul.f32 %v788, %v788
        %v1045 = vmul.f32 %v789, %v789
        %v1046 = vmul.f32 %v790, %v790
        %v1047 = vmul.f32 %v791, %v791
        %v1048 = vmul.f32 %v792, %v792
        %v1049 = vmul.f32 %v793, %v793
        %v1050 = vmul.f32 %v794, %v794
        %v1051 = vmul.f32 %v795, %v795
        %v1052 = vmul.f32 %v796, %v796
        %v1053 = vmul.f32 %v797, %v797
        %v1054 = vmul.f32 %v798, %v798
        %v1055 = vadd.f32 %v799, %v927
        %v1056 = vadd.f32 %v800, %v928
        %v1057 = vadd.f32 %v801, %v929
        %v1058 = vadd.f32 %v802, %v930
        %v1059 = vadd.f32 %v803, %v931
        %v1060 = vadd.f32 %v804, %v932
        %v1061 = vadd.f32 %v805, %v933
        %v1062 = vadd.f32 %v806, %v934
        %v1063 = vadd.f32 %v807, %v935
        %v1064 = vadd.f32 %v808, %v936
        %v1065 = vadd.f32 %v809, %v937
        %v1066 = vadd.f32 %v810, %v938
        %v1067 = vadd.f32 %v811, %v939
        %v1068 = vadd.f32 %v812, %v940
        %v1069 = vadd.f32 %v813, %v941
        %v1070 = vadd.f32 %v814, %v942
        %v1071 = vadd.f32 %v815, %v943
        %v1072 = vadd.f32 %v816, %v944
        %v1073 = vadd.f32 %v817, %v945
        %v1074 = vadd.f32 %v818, %v946
        %v1075 = vadd.f32 %v819, %v947
        %v1076 = vadd.f32 %v820, %v948
        %v1077 = vadd.f32 %v821, %v949
        %v1078 = vadd.f32 %v822, %v950
        %v1079 = vadd.f32 %v823, %v951
        %v1080 = vadd.f32 %v824, %v952
        %v1081 = vadd.f32 %v825, %v953
        %v1082 = vadd.f32 %v826, %v954
        %v1083 = vadd.f32 %v827, %v955
        %v1084 = vadd.f32 %v828, %v956
        %v1085 = vadd.f32 %v829, %v957
        %v1086 = vadd.f32 %v830, %v958
        %v1087 = vadd.f32 %v831, %v959
        %v1088 = vadd.f32 %v832, %v960
        %v1089 = vadd.f32 %v833, %v961
        %v1090 = vadd.f32 %v834, %v962
        %v1091 = vadd.f32 %v835, %v963
        %v1092 = vadd.f32 %v836, %v964
        %v1093 = vadd.f32 %v837, %v965
        %v1094 = vadd.f32 %v838, %v966
        %v1095 = vadd.f32 %v839, %v967
        %v1096 = vadd.f32 %v840, %v968
        %v1097 = vadd.f32 %v841, %v969
        %v1098 = vadd.f32 %v842, %v970
        %v1099 = vadd.f32 %v843, %v971
        %v1100 = vadd.f32 %v844, %v972
        %v1101 = vadd.f32 %v845, %v973
        %v1102 = vadd.f32 %v846, %v974
        %v1103 = vadd.f32 %v847, %v975
        %v1104 = vadd.f32 %v848, %v976
        %v1105 = vadd.f32 %v849, %v977
        %v1106 = vadd.f32 %v850, %v978
        %v1107 = vadd.f32 %v851, %v979
        %v1108 = vadd.f32 %v852, %v980
        %v1109 = vadd.f32 %v853, %v981
        %v1110 = vadd.f32 %v854, %v982
        %v1111 = vadd.f32 %v855, %v983
        %v1112 = vadd.f32 %v856, %v984
        %v1113 = vadd.f32 %v857, %v985
        %v1114 = vadd.f32 %v858, %v986
        %v1115 = vadd.f32 %v859, %v987
        %v1116 = vadd.f32 %v860, %v988
        %v1117 = vadd.f32 %v861, %v989
        %v1118 = vadd.f32 %v862, %v990
        %v1119 = vadd.f32 %v863, %v991
        %v1120 = vadd.f32 %v864, %v992
        %v1121 = vadd.f32 %v865, %v993
        %v1122 = vadd.f32 %v866, %v994
        %v1123 = vadd.f32 %v867, %v995
        %v1124 = vadd.f32 %v868, %v996
        %v1125 = vadd.f32 %v869, %v997
        %v1126 = vadd.f32 %v870, %v998
        %v1127 = vadd.f32 %v871, %v999
        %v1128 = vadd.f32 %v872, %v1000
        %v1129 = vadd.f32 %v873, %v1001
        %v1130 = vadd.f32 %v874, %v1002
        %v1131 = vadd.f32 %v875, %v1003
        %v1132 = vadd.f32 %v876, %v1004
        %v1133 = vadd.f32 %v877, %v1005
        %v1134 = vadd.f32 %v878, %v1006
        %v1135 = vadd.f32 %v879, %v1007
        %v1136 = vadd.f32 %v880, %v1008
        %v1137 = vadd.f32 %v881, %v1009
        %v1138 = vadd.f32 %v882, %v1010
        %v1139 = vadd.f32 %v883, %v1011
        %v1140 = vadd.f32 %v884, %v1012
        %v1141 = vadd.f32 %v885, %v1013
        %v1142 = vadd.f32 %v886, %v1014
        %v1143 = vadd.f32 %v887, %v1015
        %v1144 = vadd.f32 %v888, %v1016
        %v1145 = vadd.f32 %v889, %v1017
        %v1146 = vadd.f32 %v890, %v1018
        %v1147 = vadd.f32 %v891, %v1019
        %v1148 = vadd.f32 %v892, %v1020
        %v1149 = vadd.f32 %v893, %v1021
        %v1150 = vadd.f32 %v894, %v1022
        %v1151 = vadd.f32 %v895, %v1023
        %v1152 = vadd.f32 %v896, %v1024
        %v1153 = vadd.f32 %v897, %v1025
        %v1154 = vadd.f32 %v898, %v1026
        %v1155 = vadd.f32 %v899, %v1027
        %v1156 = vadd.f32 %v900, %v1028
        %v1157 = vadd.f32 %v901, %v1029
        %v1158 = vadd.f32 %v902, %v1030
        %v1159 = vadd.f32 %v903, %v1031
        %v1160 = vadd.f32 %v904, %v1032
        %v1161 = vadd.f32 %v905, %v1033
        %v1162 = vadd.f32 %v906, %v1034
        %v1163 = vadd.f32 %v907, %v1035
        %v1164 = vadd.f32 %v908, %v1036
        %v1165 = vadd.f32 %v909, %v1037
        %v1166 = vadd.f32 %v910, %v1038
        %v1167 = vadd.f32 %v911, %v1039
        %v1168 = vadd.f32 %v912, %v1040
        %v1169 = vadd.f32 %v913, %v1041
        %v1170 = vadd.f32 %v914, %v1042
        %v1171 = vadd.f32 %v915, %v1043
        %v1172 = vadd.f32 %v916, %v1044
        %v1173 = vadd.f32 %v917, %v1045
        %v1174 = vadd.f32 %v918, %v1046
        %v1175 = vadd.f32 %v919, %v1047
        %v1176 = vadd.f32 %v920, %v1048
        %v1177 = vadd.f32 %v921, %v1049
        %v1178 = vadd.f32 %v922, %v1050
        %v1179 = vadd.f32 %v923, %v1051
        %v1180 = vadd.f32 %v924, %v1052
        %v1181 = vadd.f32 %v925, %v1053
        %v1182 = vadd.f32 %v926, %v1054
        %p1183 = scmp.eq.s32.totalorder %s21, 0
        // Predicated region
        $region29: #{tpu_custom_call.1} parent=27 // pred_check
          %p1184 = pneg %p1183
        $region30: #{tpu_custom_call.1} parent=27 // pred_check_branch
          %1186 = sbr.rel (%p1184) target = $region32
        $region31: #{tpu_custom_call.1} parent=27 // pred_region
          %1187 = vst [vmem:[#allocation2] sm:$0xff] %v1055
          %1188 = vst [vmem:[#allocation2 + $0x8] sm:$0xff] %v1056
          %1189 = vst [vmem:[#allocation2 + $0x10] sm:$0xff] %v1057
          %1190 = vst [vmem:[#allocation2 + $0x18] sm:$0xff] %v1058
          %1191 = vst [vmem:[#allocation2 + $0x20] sm:$0xff] %v1059
          %1192 = vst [vmem:[#allocation2 + $0x28] sm:$0xff] %v1060
          %1193 = vst [vmem:[#allocation2 + $0x30] sm:$0xff] %v1061
          %1194 = vst [vmem:[#allocation2 + $0x38] sm:$0xff] %v1062
          %1195 = vst [vmem:[#allocation2 + $0x40] sm:$0xff] %v1063
          %1196 = vst [vmem:[#allocation2 + $0x48] sm:$0xff] %v1064
          %1197 = vst [vmem:[#allocation2 + $0x50] sm:$0xff] %v1065
          %1198 = vst [vmem:[#allocation2 + $0x58] sm:$0xff] %v1066
          %1199 = vst [vmem:[#allocation2 + $0x60] sm:$0xff] %v1067
          %1200 = vst [vmem:[#allocation2 + $0x68] sm:$0xff] %v1068
          %1201 = vst [vmem:[#allocation2 + $0x70] sm:$0xff] %v1069
          %1202 = vst [vmem:[#allocation2 + $0x78] sm:$0xff] %v1070
          %1203 = vst [vmem:[#allocation2 + $0x80] sm:$0xff] %v1071
          %1204 = vst [vmem:[#allocation2 + $0x88] sm:$0xff] %v1072
          %1205 = vst [vmem:[#allocation2 + $0x90] sm:$0xff] %v1073
          %1206 = vst [vmem:[#allocation2 + $0x98] sm:$0xff] %v1074
          %1207 = vst [vmem:[#allocation2 + $0xa0] sm:$0xff] %v1075
          %1208 = vst [vmem:[#allocation2 + $0xa8] sm:$0xff] %v1076
          %1209 = vst [vmem:[#allocation2 + $0xb0] sm:$0xff] %v1077
          %1210 = vst [vmem:[#allocation2 + $0xb8] sm:$0xff] %v1078
          %1211 = vst [vmem:[#allocation2 + $0xc0] sm:$0xff] %v1079
          %1212 = vst [vmem:[#allocation2 + $0xc8] sm:$0xff] %v1080
          %1213 = vst [vmem:[#allocation2 + $0xd0] sm:$0xff] %v1081
          %1214 = vst [vmem:[#allocation2 + $0xd8] sm:$0xff] %v1082
          %1215 = vst [vmem:[#allocation2 + $0xe0] sm:$0xff] %v1083
          %1216 = vst [vmem:[#allocation2 + $0xe8] sm:$0xff] %v1084
          %1217 = vst [vmem:[#allocation2 + $0xf0] sm:$0xff] %v1085
          %1218 = vst [vmem:[#allocation2 + $0xf8] sm:$0xff] %v1086
          %1219 = vst [vmem:[#allocation2 + $0x100] sm:$0xff] %v1087
          %1220 = vst [vmem:[#allocation2 + $0x108] sm:$0xff] %v1088
          %1221 = vst [vmem:[#allocation2 + $0x110] sm:$0xff] %v1089
          %1222 = vst [vmem:[#allocation2 + $0x118] sm:$0xff] %v1090
          %1223 = vst [vmem:[#allocation2 + $0x120] sm:$0xff] %v1091
          %1224 = vst [vmem:[#allocation2 + $0x128] sm:$0xff] %v1092
          %1225 = vst [vmem:[#allocation2 + $0x130] sm:$0xff] %v1093
          %1226 = vst [vmem:[#allocation2 + $0x138] sm:$0xff] %v1094
          %1227 = vst [vmem:[#allocation2 + $0x140] sm:$0xff] %v1095
          %1228 = vst [vmem:[#allocation2 + $0x148] sm:$0xff] %v1096
          %1229 = vst [vmem:[#allocation2 + $0x150] sm:$0xff] %v1097
          %1230 = vst [vmem:[#allocation2 + $0x158] sm:$0xff] %v1098
          %1231 = vst [vmem:[#allocation2 + $0x160] sm:$0xff] %v1099
          %1232 = vst [vmem:[#allocation2 + $0x168] sm:$0xff] %v1100
          %1233 = vst [vmem:[#allocation2 + $0x170] sm:$0xff] %v1101
          %1234 = vst [vmem:[#allocation2 + $0x178] sm:$0xff] %v1102
          %1235 = vst [vmem:[#allocation2 + $0x180] sm:$0xff] %v1103
          %1236 = vst [vmem:[#allocation2 + $0x188] sm:$0xff] %v1104
          %1237 = vst [vmem:[#allocation2 + $0x190] sm:$0xff] %v1105
          %1238 = vst [vmem:[#allocation2 + $0x198] sm:$0xff] %v1106
          %1239 = vst [vmem:[#allocation2 + $0x1a0] sm:$0xff] %v1107
          %1240 = vst [vmem:[#allocation2 + $0x1a8] sm:$0xff] %v1108
          %1241 = vst [vmem:[#allocation2 + $0x1b0] sm:$0xff] %v1109
          %1242 = vst [vmem:[#allocation2 + $0x1b8] sm:$0xff] %v1110
          %1243 = vst [vmem:[#allocation2 + $0x1c0] sm:$0xff] %v1111
          %1244 = vst [vmem:[#allocation2 + $0x1c8] sm:$0xff] %v1112
          %1245 = vst [vmem:[#allocation2 + $0x1d0] sm:$0xff] %v1113
          %1246 = vst [vmem:[#allocation2 + $0x1d8] sm:$0xff] %v1114
          %1247 = vst [vmem:[#allocation2 + $0x1e0] sm:$0xff] %v1115
          %1248 = vst [vmem:[#allocation2 + $0x1e8] sm:$0xff] %v1116
          %1249 = vst [vmem:[#allocation2 + $0x1f0] sm:$0xff] %v1117
          %1250 = vst [vmem:[#allocation2 + $0x1f8] sm:$0xff] %v1118
          %1251 = vst [vmem:[#allocation2 + $0x200] sm:$0xff] %v1119
          %1252 = vst [vmem:[#allocation2 + $0x208] sm:$0xff] %v1120
          %1253 = vst [vmem:[#allocation2 + $0x210] sm:$0xff] %v1121
          %1254 = vst [vmem:[#allocation2 + $0x218] sm:$0xff] %v1122
          %1255 = vst [vmem:[#allocation2 + $0x220] sm:$0xff] %v1123
          %1256 = vst [vmem:[#allocation2 + $0x228] sm:$0xff] %v1124
          %1257 = vst [vmem:[#allocation2 + $0x230] sm:$0xff] %v1125
          %1258 = vst [vmem:[#allocation2 + $0x238] sm:$0xff] %v1126
          %1259 = vst [vmem:[#allocation2 + $0x240] sm:$0xff] %v1127
          %1260 = vst [vmem:[#allocation2 + $0x248] sm:$0xff] %v1128
          %1261 = vst [vmem:[#allocation2 + $0x250] sm:$0xff] %v1129
          %1262 = vst [vmem:[#allocation2 + $0x258] sm:$0xff] %v1130
          %1263 = vst [vmem:[#allocation2 + $0x260] sm:$0xff] %v1131
          %1264 = vst [vmem:[#allocation2 + $0x268] sm:$0xff] %v1132
          %1265 = vst [vmem:[#allocation2 + $0x270] sm:$0xff] %v1133
          %1266 = vst [vmem:[#allocation2 + $0x278] sm:$0xff] %v1134
          %1267 = vst [vmem:[#allocation2 + $0x280] sm:$0xff] %v1135
          %1268 = vst [vmem:[#allocation2 + $0x288] sm:$0xff] %v1136
          %1269 = vst [vmem:[#allocation2 + $0x290] sm:$0xff] %v1137
          %1270 = vst [vmem:[#allocation2 + $0x298] sm:$0xff] %v1138
          %1271 = vst [vmem:[#allocation2 + $0x2a0] sm:$0xff] %v1139
          %1272 = vst [vmem:[#allocation2 + $0x2a8] sm:$0xff] %v1140
          %1273 = vst [vmem:[#allocation2 + $0x2b0] sm:$0xff] %v1141
          %1274 = vst [vmem:[#allocation2 + $0x2b8] sm:$0xff] %v1142
          %1275 = vst [vmem:[#allocation2 + $0x2c0] sm:$0xff] %v1143
          %1276 = vst [vmem:[#allocation2 + $0x2c8] sm:$0xff] %v1144
          %1277 = vst [vmem:[#allocation2 + $0x2d0] sm:$0xff] %v1145
          %1278 = vst [vmem:[#allocation2 + $0x2d8] sm:$0xff] %v1146
          %1279 = vst [vmem:[#allocation2 + $0x2e0] sm:$0xff] %v1147
          %1280 = vst [vmem:[#allocation2 + $0x2e8] sm:$0xff] %v1148
          %1281 = vst [vmem:[#allocation2 + $0x2f0] sm:$0xff] %v1149
          %1282 = vst [vmem:[#allocation2 + $0x2f8] sm:$0xff] %v1150
          %1283 = vst [vmem:[#allocation2 + $0x300] sm:$0xff] %v1151
          %1284 = vst [vmem:[#allocation2 + $0x308] sm:$0xff] %v1152
          %1285 = vst [vmem:[#allocation2 + $0x310] sm:$0xff] %v1153
          %1286 = vst [vmem:[#allocation2 + $0x318] sm:$0xff] %v1154
          %1287 = vst [vmem:[#allocation2 + $0x320] sm:$0xff] %v1155
          %1288 = vst [vmem:[#allocation2 + $0x328] sm:$0xff] %v1156
          %1289 = vst [vmem:[#allocation2 + $0x330] sm:$0xff] %v1157
          %1290 = vst [vmem:[#allocation2 + $0x338] sm:$0xff] %v1158
          %1291 = vst [vmem:[#allocation2 + $0x340] sm:$0xff] %v1159
          %1292 = vst [vmem:[#allocation2 + $0x348] sm:$0xff] %v1160
          %1293 = vst [vmem:[#allocation2 + $0x350] sm:$0xff] %v1161
          %1294 = vst [vmem:[#allocation2 + $0x358] sm:$0xff] %v1162
          %1295 = vst [vmem:[#allocation2 + $0x360] sm:$0xff] %v1163
          %1296 = vst [vmem:[#allocation2 + $0x368] sm:$0xff] %v1164
          %1297 = vst [vmem:[#allocation2 + $0x370] sm:$0xff] %v1165
          %1298 = vst [vmem:[#allocation2 + $0x378] sm:$0xff] %v1166
          %1299 = vst [vmem:[#allocation2 + $0x380] sm:$0xff] %v1167
          %1300 = vst [vmem:[#allocation2 + $0x388] sm:$0xff] %v1168
          %1301 = vst [vmem:[#allocation2 + $0x390] sm:$0xff] %v1169
          %1302 = vst [vmem:[#allocation2 + $0x398] sm:$0xff] %v1170
          %1303 = vst [vmem:[#allocation2 + $0x3a0] sm:$0xff] %v1171
          %1304 = vst [vmem:[#allocation2 + $0x3a8] sm:$0xff] %v1172
          %1305 = vst [vmem:[#allocation2 + $0x3b0] sm:$0xff] %v1173
          %1306 = vst [vmem:[#allocation2 + $0x3b8] sm:$0xff] %v1174
          %1307 = vst [vmem:[#allocation2 + $0x3c0] sm:$0xff] %v1175
          %1308 = vst [vmem:[#allocation2 + $0x3c8] sm:$0xff] %v1176
          %1309 = vst [vmem:[#allocation2 + $0x3d0] sm:$0xff] %v1177
          %1310 = vst [vmem:[#allocation2 + $0x3d8] sm:$0xff] %v1178
          %1311 = vst [vmem:[#allocation2 + $0x3e0] sm:$0xff] %v1179
          %1312 = vst [vmem:[#allocation2 + $0x3e8] sm:$0xff] %v1180
          %1313 = vst [vmem:[#allocation2 + $0x3f0] sm:$0xff] %v1181
          %1314 = vst [vmem:[#allocation2 + $0x3f8] sm:$0xff] %v1182
        $region32: #{tpu_custom_call.1} parent=27 // pred_fallthru
          _
        %p1315 = scmp.gt.s32.totalorder %s21, 0
        // Predicated region
        $region33: #{tpu_custom_call.1} parent=27 // pred_check
          %p1316 = pneg %p1315
        $region34: #{tpu_custom_call.1} parent=27 // pred_check_branch
          %1318 = sbr.rel (%p1316) target = $region36
        $region35: #{tpu_custom_call.1} parent=27 // pred_region
          %v1319 = vld [vmem:[#allocation2] sm:$0xff]
          %v1320 = vld [vmem:[#allocation2 + $0x8] sm:$0xff]
          %v1321 = vld [vmem:[#allocation2 + $0x10] sm:$0xff]
          %v1322 = vld [vmem:[#allocation2 + $0x18] sm:$0xff]
          %v1323 = vld [vmem:[#allocation2 + $0x20] sm:$0xff]
          %v1324 = vld [vmem:[#allocation2 + $0x28] sm:$0xff]
          %v1325 = vld [vmem:[#allocation2 + $0x30] sm:$0xff]
          %v1326 = vld [vmem:[#allocation2 + $0x38] sm:$0xff]
          %v1327 = vld [vmem:[#allocation2 + $0x40] sm:$0xff]
          %v1328 = vld [vmem:[#allocation2 + $0x48] sm:$0xff]
          %v1329 = vld [vmem:[#allocation2 + $0x50] sm:$0xff]
          %v1330 = vld [vmem:[#allocation2 + $0x58] sm:$0xff]
          %v1331 = vld [vmem:[#allocation2 + $0x60] sm:$0xff]
          %v1332 = vld [vmem:[#allocation2 + $0x68] sm:$0xff]
          %v1333 = vld [vmem:[#allocation2 + $0x70] sm:$0xff]
          %v1334 = vld [vmem:[#allocation2 + $0x78] sm:$0xff]
          %v1335 = vld [vmem:[#allocation2 + $0x80] sm:$0xff]
          %v1336 = vld [vmem:[#allocation2 + $0x88] sm:$0xff]
          %v1337 = vld [vmem:[#allocation2 + $0x90] sm:$0xff]
          %v1338 = vld [vmem:[#allocation2 + $0x98] sm:$0xff]
          %v1339 = vld [vmem:[#allocation2 + $0xa0] sm:$0xff]
          %v1340 = vld [vmem:[#allocation2 + $0xa8] sm:$0xff]
          %v1341 = vld [vmem:[#allocation2 + $0xb0] sm:$0xff]
          %v1342 = vld [vmem:[#allocation2 + $0xb8] sm:$0xff]
          %v1343 = vld [vmem:[#allocation2 + $0xc0] sm:$0xff]
          %v1344 = vld [vmem:[#allocation2 + $0xc8] sm:$0xff]
          %v1345 = vld [vmem:[#allocation2 + $0xd0] sm:$0xff]
          %v1346 = vld [vmem:[#allocation2 + $0xd8] sm:$0xff]
          %v1347 = vld [vmem:[#allocation2 + $0xe0] sm:$0xff]
          %v1348 = vld [vmem:[#allocation2 + $0xe8] sm:$0xff]
          %v1349 = vld [vmem:[#allocation2 + $0xf0] sm:$0xff]
          %v1350 = vld [vmem:[#allocation2 + $0xf8] sm:$0xff]
          %v1351 = vld [vmem:[#allocation2 + $0x100] sm:$0xff]
          %v1352 = vld [vmem:[#allocation2 + $0x108] sm:$0xff]
          %v1353 = vld [vmem:[#allocation2 + $0x110] sm:$0xff]
          %v1354 = vld [vmem:[#allocation2 + $0x118] sm:$0xff]
          %v1355 = vld [vmem:[#allocation2 + $0x120] sm:$0xff]
          %v1356 = vld [vmem:[#allocation2 + $0x128] sm:$0xff]
          %v1357 = vld [vmem:[#allocation2 + $0x130] sm:$0xff]
          %v1358 = vld [vmem:[#allocation2 + $0x138] sm:$0xff]
          %v1359 = vld [vmem:[#allocation2 + $0x140] sm:$0xff]
          %v1360 = vld [vmem:[#allocation2 + $0x148] sm:$0xff]
          %v1361 = vld [vmem:[#allocation2 + $0x150] sm:$0xff]
          %v1362 = vld [vmem:[#allocation2 + $0x158] sm:$0xff]
          %v1363 = vld [vmem:[#allocation2 + $0x160] sm:$0xff]
          %v1364 = vld [vmem:[#allocation2 + $0x168] sm:$0xff]
          %v1365 = vld [vmem:[#allocation2 + $0x170] sm:$0xff]
          %v1366 = vld [vmem:[#allocation2 + $0x178] sm:$0xff]
          %v1367 = vld [vmem:[#allocation2 + $0x180] sm:$0xff]
          %v1368 = vld [vmem:[#allocation2 + $0x188] sm:$0xff]
          %v1369 = vld [vmem:[#allocation2 + $0x190] sm:$0xff]
          %v1370 = vld [vmem:[#allocation2 + $0x198] sm:$0xff]
          %v1371 = vld [vmem:[#allocation2 + $0x1a0] sm:$0xff]
          %v1372 = vld [vmem:[#allocation2 + $0x1a8] sm:$0xff]
          %v1373 = vld [vmem:[#allocation2 + $0x1b0] sm:$0xff]
          %v1374 = vld [vmem:[#allocation2 + $0x1b8] sm:$0xff]
          %v1375 = vld [vmem:[#allocation2 + $0x1c0] sm:$0xff]
          %v1376 = vld [vmem:[#allocation2 + $0x1c8] sm:$0xff]
          %v1377 = vld [vmem:[#allocation2 + $0x1d0] sm:$0xff]
          %v1378 = vld [vmem:[#allocation2 + $0x1d8] sm:$0xff]
          %v1379 = vld [vmem:[#allocation2 + $0x1e0] sm:$0xff]
          %v1380 = vld [vmem:[#allocation2 + $0x1e8] sm:$0xff]
          %v1381 = vld [vmem:[#allocation2 + $0x1f0] sm:$0xff]
          %v1382 = vld [vmem:[#allocation2 + $0x1f8] sm:$0xff]
          %v1383 = vld [vmem:[#allocation2 + $0x200] sm:$0xff]
          %v1384 = vld [vmem:[#allocation2 + $0x208] sm:$0xff]
          %v1385 = vld [vmem:[#allocation2 + $0x210] sm:$0xff]
          %v1386 = vld [vmem:[#allocation2 + $0x218] sm:$0xff]
          %v1387 = vld [vmem:[#allocation2 + $0x220] sm:$0xff]
          %v1388 = vld [vmem:[#allocation2 + $0x228] sm:$0xff]
          %v1389 = vld [vmem:[#allocation2 + $0x230] sm:$0xff]
          %v1390 = vld [vmem:[#allocation2 + $0x238] sm:$0xff]
          %v1391 = vld [vmem:[#allocation2 + $0x240] sm:$0xff]
          %v1392 = vld [vmem:[#allocation2 + $0x248] sm:$0xff]
          %v1393 = vld [vmem:[#allocation2 + $0x250] sm:$0xff]
          %v1394 = vld [vmem:[#allocation2 + $0x258] sm:$0xff]
          %v1395 = vld [vmem:[#allocation2 + $0x260] sm:$0xff]
          %v1396 = vld [vmem:[#allocation2 + $0x268] sm:$0xff]
          %v1397 = vld [vmem:[#allocation2 + $0x270] sm:$0xff]
          %v1398 = vld [vmem:[#allocation2 + $0x278] sm:$0xff]
          %v1399 = vld [vmem:[#allocation2 + $0x280] sm:$0xff]
          %v1400 = vld [vmem:[#allocation2 + $0x288] sm:$0xff]
          %v1401 = vld [vmem:[#allocation2 + $0x290] sm:$0xff]
          %v1402 = vld [vmem:[#allocation2 + $0x298] sm:$0xff]
          %v1403 = vld [vmem:[#allocation2 + $0x2a0] sm:$0xff]
          %v1404 = vld [vmem:[#allocation2 + $0x2a8] sm:$0xff]
          %v1405 = vld [vmem:[#allocation2 + $0x2b0] sm:$0xff]
          %v1406 = vld [vmem:[#allocation2 + $0x2b8] sm:$0xff]
          %v1407 = vld [vmem:[#allocation2 + $0x2c0] sm:$0xff]
          %v1408 = vld [vmem:[#allocation2 + $0x2c8] sm:$0xff]
          %v1409 = vld [vmem:[#allocation2 + $0x2d0] sm:$0xff]
          %v1410 = vld [vmem:[#allocation2 + $0x2d8] sm:$0xff]
          %v1411 = vld [vmem:[#allocation2 + $0x2e0] sm:$0xff]
          %v1412 = vld [vmem:[#allocation2 + $0x2e8] sm:$0xff]
          %v1413 = vld [vmem:[#allocation2 + $0x2f0] sm:$0xff]
          %v1414 = vld [vmem:[#allocation2 + $0x2f8] sm:$0xff]
          %v1415 = vld [vmem:[#allocation2 + $0x300] sm:$0xff]
          %v1416 = vld [vmem:[#allocation2 + $0x308] sm:$0xff]
          %v1417 = vld [vmem:[#allocation2 + $0x310] sm:$0xff]
          %v1418 = vld [vmem:[#allocation2 + $0x318] sm:$0xff]
          %v1419 = vld [vmem:[#allocation2 + $0x320] sm:$0xff]
          %v1420 = vld [vmem:[#allocation2 + $0x328] sm:$0xff]
          %v1421 = vld [vmem:[#allocation2 + $0x330] sm:$0xff]
          %v1422 = vld [vmem:[#allocation2 + $0x338] sm:$0xff]
          %v1423 = vld [vmem:[#allocation2 + $0x340] sm:$0xff]
          %v1424 = vld [vmem:[#allocation2 + $0x348] sm:$0xff]
          %v1425 = vld [vmem:[#allocation2 + $0x350] sm:$0xff]
          %v1426 = vld [vmem:[#allocation2 + $0x358] sm:$0xff]
          %v1427 = vld [vmem:[#allocation2 + $0x360] sm:$0xff]
          %v1428 = vld [vmem:[#allocation2 + $0x368] sm:$0xff]
          %v1429 = vld [vmem:[#allocation2 + $0x370] sm:$0xff]
          %v1430 = vld [vmem:[#allocation2 + $0x378] sm:$0xff]
          %v1431 = vld [vmem:[#allocation2 + $0x380] sm:$0xff]
          %v1432 = vld [vmem:[#allocation2 + $0x388] sm:$0xff]
          %v1433 = vld [vmem:[#allocation2 + $0x390] sm:$0xff]
          %v1434 = vld [vmem:[#allocation2 + $0x398] sm:$0xff]
          %v1435 = vld [vmem:[#allocation2 + $0x3a0] sm:$0xff]
          %v1436 = vld [vmem:[#allocation2 + $0x3a8] sm:$0xff]
          %v1437 = vld [vmem:[#allocation2 + $0x3b0] sm:$0xff]
          %v1438 = vld [vmem:[#allocation2 + $0x3b8] sm:$0xff]
          %v1439 = vld [vmem:[#allocation2 + $0x3c0] sm:$0xff]
          %v1440 = vld [vmem:[#allocation2 + $0x3c8] sm:$0xff]
          %v1441 = vld [vmem:[#allocation2 + $0x3d0] sm:$0xff]
          %v1442 = vld [vmem:[#allocation2 + $0x3d8] sm:$0xff]
          %v1443 = vld [vmem:[#allocation2 + $0x3e0] sm:$0xff]
          %v1444 = vld [vmem:[#allocation2 + $0x3e8] sm:$0xff]
          %v1445 = vld [vmem:[#allocation2 + $0x3f0] sm:$0xff]
          %v1446 = vld [vmem:[#allocation2 + $0x3f8] sm:$0xff]
          %v1447 = vmin.f32 %v1319, %v1055
          %v1448 = vmin.f32 %v1320, %v1056
          %v1449 = vmin.f32 %v1321, %v1057
          %v1450 = vmin.f32 %v1322, %v1058
          %v1451 = vmin.f32 %v1323, %v1059
          %v1452 = vmin.f32 %v1324, %v1060
          %v1453 = vmin.f32 %v1325, %v1061
          %v1454 = vmin.f32 %v1326, %v1062
          %v1455 = vmin.f32 %v1327, %v1063
          %v1456 = vmin.f32 %v1328, %v1064
          %v1457 = vmin.f32 %v1329, %v1065
          %v1458 = vmin.f32 %v1330, %v1066
          %v1459 = vmin.f32 %v1331, %v1067
          %v1460 = vmin.f32 %v1332, %v1068
          %v1461 = vmin.f32 %v1333, %v1069
          %v1462 = vmin.f32 %v1334, %v1070
          %v1463 = vmin.f32 %v1335, %v1071
          %v1464 = vmin.f32 %v1336, %v1072
          %v1465 = vmin.f32 %v1337, %v1073
          %v1466 = vmin.f32 %v1338, %v1074
          %v1467 = vmin.f32 %v1339, %v1075
          %v1468 = vmin.f32 %v1340, %v1076
          %v1469 = vmin.f32 %v1341, %v1077
          %v1470 = vmin.f32 %v1342, %v1078
          %v1471 = vmin.f32 %v1343, %v1079
          %v1472 = vmin.f32 %v1344, %v1080
          %v1473 = vmin.f32 %v1345, %v1081
          %v1474 = vmin.f32 %v1346, %v1082
          %v1475 = vmin.f32 %v1347, %v1083
          %v1476 = vmin.f32 %v1348, %v1084
          %v1477 = vmin.f32 %v1349, %v1085
          %v1478 = vmin.f32 %v1350, %v1086
          %v1479 = vmin.f32 %v1351, %v1087
          %v1480 = vmin.f32 %v1352, %v1088
          %v1481 = vmin.f32 %v1353, %v1089
          %v1482 = vmin.f32 %v1354, %v1090
          %v1483 = vmin.f32 %v1355, %v1091
          %v1484 = vmin.f32 %v1356, %v1092
          %v1485 = vmin.f32 %v1357, %v1093
          %v1486 = vmin.f32 %v1358, %v1094
          %v1487 = vmin.f32 %v1359, %v1095
          %v1488 = vmin.f32 %v1360, %v1096
          %v1489 = vmin.f32 %v1361, %v1097
          %v1490 = vmin.f32 %v1362, %v1098
          %v1491 = vmin.f32 %v1363, %v1099
          %v1492 = vmin.f32 %v1364, %v1100
          %v1493 = vmin.f32 %v1365, %v1101
          %v1494 = vmin.f32 %v1366, %v1102
          %v1495 = vmin.f32 %v1367, %v1103
          %v1496 = vmin.f32 %v1368, %v1104
          %v1497 = vmin.f32 %v1369, %v1105
          %v1498 = vmin.f32 %v1370, %v1106
          %v1499 = vmin.f32 %v1371, %v1107
          %v1500 = vmin.f32 %v1372, %v1108
          %v1501 = vmin.f32 %v1373, %v1109
          %v1502 = vmin.f32 %v1374, %v1110
          %v1503 = vmin.f32 %v1375, %v1111
          %v1504 = vmin.f32 %v1376, %v1112
          %v1505 = vmin.f32 %v1377, %v1113
          %v1506 = vmin.f32 %v1378, %v1114
          %v1507 = vmin.f32 %v1379, %v1115
          %v1508 = vmin.f32 %v1380, %v1116
          %v1509 = vmin.f32 %v1381, %v1117
          %v1510 = vmin.f32 %v1382, %v1118
          %v1511 = vmin.f32 %v1383, %v1119
          %v1512 = vmin.f32 %v1384, %v1120
          %v1513 = vmin.f32 %v1385, %v1121
          %v1514 = vmin.f32 %v1386, %v1122
          %v1515 = vmin.f32 %v1387, %v1123
          %v1516 = vmin.f32 %v1388, %v1124
          %v1517 = vmin.f32 %v1389, %v1125
          %v1518 = vmin.f32 %v1390, %v1126
          %v1519 = vmin.f32 %v1391, %v1127
          %v1520 = vmin.f32 %v1392, %v1128
          %v1521 = vmin.f32 %v1393, %v1129
          %v1522 = vmin.f32 %v1394, %v1130
          %v1523 = vmin.f32 %v1395, %v1131
          %v1524 = vmin.f32 %v1396, %v1132
          %v1525 = vmin.f32 %v1397, %v1133
          %v1526 = vmin.f32 %v1398, %v1134
          %v1527 = vmin.f32 %v1399, %v1135
          %v1528 = vmin.f32 %v1400, %v1136
          %v1529 = vmin.f32 %v1401, %v1137
          %v1530 = vmin.f32 %v1402, %v1138
          %v1531 = vmin.f32 %v1403, %v1139
          %v1532 = vmin.f32 %v1404, %v1140
          %v1533 = vmin.f32 %v1405, %v1141
          %v1534 = vmin.f32 %v1406, %v1142
          %v1535 = vmin.f32 %v1407, %v1143
          %v1536 = vmin.f32 %v1408, %v1144
          %v1537 = vmin.f32 %v1409, %v1145
          %v1538 = vmin.f32 %v1410, %v1146
          %v1539 = vmin.f32 %v1411, %v1147
          %v1540 = vmin.f32 %v1412, %v1148
          %v1541 = vmin.f32 %v1413, %v1149
          %v1542 = vmin.f32 %v1414, %v1150
          %v1543 = vmin.f32 %v1415, %v1151
          %v1544 = vmin.f32 %v1416, %v1152
          %v1545 = vmin.f32 %v1417, %v1153
          %v1546 = vmin.f32 %v1418, %v1154
          %v1547 = vmin.f32 %v1419, %v1155
          %v1548 = vmin.f32 %v1420, %v1156
          %v1549 = vmin.f32 %v1421, %v1157
          %v1550 = vmin.f32 %v1422, %v1158
          %v1551 = vmin.f32 %v1423, %v1159
          %v1552 = vmin.f32 %v1424, %v1160
          %v1553 = vmin.f32 %v1425, %v1161
          %v1554 = vmin.f32 %v1426, %v1162
          %v1555 = vmin.f32 %v1427, %v1163
          %v1556 = vmin.f32 %v1428, %v1164
          %v1557 = vmin.f32 %v1429, %v1165
          %v1558 = vmin.f32 %v1430, %v1166
          %v1559 = vmin.f32 %v1431, %v1167
          %v1560 = vmin.f32 %v1432, %v1168
          %v1561 = vmin.f32 %v1433, %v1169
          %v1562 = vmin.f32 %v1434, %v1170
          %v1563 = vmin.f32 %v1435, %v1171
          %v1564 = vmin.f32 %v1436, %v1172
          %v1565 = vmin.f32 %v1437, %v1173
          %v1566 = vmin.f32 %v1438, %v1174
          %v1567 = vmin.f32 %v1439, %v1175
          %v1568 = vmin.f32 %v1440, %v1176
          %v1569 = vmin.f32 %v1441, %v1177
          %v1570 = vmin.f32 %v1442, %v1178
          %v1571 = vmin.f32 %v1443, %v1179
          %v1572 = vmin.f32 %v1444, %v1180
          %v1573 = vmin.f32 %v1445, %v1181
          %v1574 = vmin.f32 %v1446, %v1182
          %1575 = vst [vmem:[#allocation2] sm:$0xff] %v1447
          %1576 = vst [vmem:[#allocation2 + $0x8] sm:$0xff] %v1448
          %1577 = vst [vmem:[#allocation2 + $0x10] sm:$0xff] %v1449
          %1578 = vst [vmem:[#allocation2 + $0x18] sm:$0xff] %v1450
          %1579 = vst [vmem:[#allocation2 + $0x20] sm:$0xff] %v1451
          %1580 = vst [vmem:[#allocation2 + $0x28] sm:$0xff] %v1452
          %1581 = vst [vmem:[#allocation2 + $0x30] sm:$0xff] %v1453
          %1582 = vst [vmem:[#allocation2 + $0x38] sm:$0xff] %v1454
          %1583 = vst [vmem:[#allocation2 + $0x40] sm:$0xff] %v1455
          %1584 = vst [vmem:[#allocation2 + $0x48] sm:$0xff] %v1456
          %1585 = vst [vmem:[#allocation2 + $0x50] sm:$0xff] %v1457
          %1586 = vst [vmem:[#allocation2 + $0x58] sm:$0xff] %v1458
          %1587 = vst [vmem:[#allocation2 + $0x60] sm:$0xff] %v1459
          %1588 = vst [vmem:[#allocation2 + $0x68] sm:$0xff] %v1460
          %1589 = vst [vmem:[#allocation2 + $0x70] sm:$0xff] %v1461
          %1590 = vst [vmem:[#allocation2 + $0x78] sm:$0xff] %v1462
          %1591 = vst [vmem:[#allocation2 + $0x80] sm:$0xff] %v1463
          %1592 = vst [vmem:[#allocation2 + $0x88] sm:$0xff] %v1464
          %1593 = vst [vmem:[#allocation2 + $0x90] sm:$0xff] %v1465
          %1594 = vst [vmem:[#allocation2 + $0x98] sm:$0xff] %v1466
          %1595 = vst [vmem:[#allocation2 + $0xa0] sm:$0xff] %v1467
          %1596 = vst [vmem:[#allocation2 + $0xa8] sm:$0xff] %v1468
          %1597 = vst [vmem:[#allocation2 + $0xb0] sm:$0xff] %v1469
          %1598 = vst [vmem:[#allocation2 + $0xb8] sm:$0xff] %v1470
          %1599 = vst [vmem:[#allocation2 + $0xc0] sm:$0xff] %v1471
          %1600 = vst [vmem:[#allocation2 + $0xc8] sm:$0xff] %v1472
          %1601 = vst [vmem:[#allocation2 + $0xd0] sm:$0xff] %v1473
          %1602 = vst [vmem:[#allocation2 + $0xd8] sm:$0xff] %v1474
          %1603 = vst [vmem:[#allocation2 + $0xe0] sm:$0xff] %v1475
          %1604 = vst [vmem:[#allocation2 + $0xe8] sm:$0xff] %v1476
          %1605 = vst [vmem:[#allocation2 + $0xf0] sm:$0xff] %v1477
          %1606 = vst [vmem:[#allocation2 + $0xf8] sm:$0xff] %v1478
          %1607 = vst [vmem:[#allocation2 + $0x100] sm:$0xff] %v1479
          %1608 = vst [vmem:[#allocation2 + $0x108] sm:$0xff] %v1480
          %1609 = vst [vmem:[#allocation2 + $0x110] sm:$0xff] %v1481
          %1610 = vst [vmem:[#allocation2 + $0x118] sm:$0xff] %v1482
          %1611 = vst [vmem:[#allocation2 + $0x120] sm:$0xff] %v1483
          %1612 = vst [vmem:[#allocation2 + $0x128] sm:$0xff] %v1484
          %1613 = vst [vmem:[#allocation2 + $0x130] sm:$0xff] %v1485
          %1614 = vst [vmem:[#allocation2 + $0x138] sm:$0xff] %v1486
          %1615 = vst [vmem:[#allocation2 + $0x140] sm:$0xff] %v1487
          %1616 = vst [vmem:[#allocation2 + $0x148] sm:$0xff] %v1488
          %1617 = vst [vmem:[#allocation2 + $0x150] sm:$0xff] %v1489
          %1618 = vst [vmem:[#allocation2 + $0x158] sm:$0xff] %v1490
          %1619 = vst [vmem:[#allocation2 + $0x160] sm:$0xff] %v1491
          %1620 = vst [vmem:[#allocation2 + $0x168] sm:$0xff] %v1492
          %1621 = vst [vmem:[#allocation2 + $0x170] sm:$0xff] %v1493
          %1622 = vst [vmem:[#allocation2 + $0x178] sm:$0xff] %v1494
          %1623 = vst [vmem:[#allocation2 + $0x180] sm:$0xff] %v1495
          %1624 = vst [vmem:[#allocation2 + $0x188] sm:$0xff] %v1496
          %1625 = vst [vmem:[#allocation2 + $0x190] sm:$0xff] %v1497
          %1626 = vst [vmem:[#allocation2 + $0x198] sm:$0xff] %v1498
          %1627 = vst [vmem:[#allocation2 + $0x1a0] sm:$0xff] %v1499
          %1628 = vst [vmem:[#allocation2 + $0x1a8] sm:$0xff] %v1500
          %1629 = vst [vmem:[#allocation2 + $0x1b0] sm:$0xff] %v1501
          %1630 = vst [vmem:[#allocation2 + $0x1b8] sm:$0xff] %v1502
          %1631 = vst [vmem:[#allocation2 + $0x1c0] sm:$0xff] %v1503
          %1632 = vst [vmem:[#allocation2 + $0x1c8] sm:$0xff] %v1504
          %1633 = vst [vmem:[#allocation2 + $0x1d0] sm:$0xff] %v1505
          %1634 = vst [vmem:[#allocation2 + $0x1d8] sm:$0xff] %v1506
          %1635 = vst [vmem:[#allocation2 + $0x1e0] sm:$0xff] %v1507
          %1636 = vst [vmem:[#allocation2 + $0x1e8] sm:$0xff] %v1508
          %1637 = vst [vmem:[#allocation2 + $0x1f0] sm:$0xff] %v1509
          %1638 = vst [vmem:[#allocation2 + $0x1f8] sm:$0xff] %v1510
          %1639 = vst [vmem:[#allocation2 + $0x200] sm:$0xff] %v1511
          %1640 = vst [vmem:[#allocation2 + $0x208] sm:$0xff] %v1512
          %1641 = vst [vmem:[#allocation2 + $0x210] sm:$0xff] %v1513
          %1642 = vst [vmem:[#allocation2 + $0x218] sm:$0xff] %v1514
          %1643 = vst [vmem:[#allocation2 + $0x220] sm:$0xff] %v1515
          %1644 = vst [vmem:[#allocation2 + $0x228] sm:$0xff] %v1516
          %1645 = vst [vmem:[#allocation2 + $0x230] sm:$0xff] %v1517
          %1646 = vst [vmem:[#allocation2 + $0x238] sm:$0xff] %v1518
          %1647 = vst [vmem:[#allocation2 + $0x240] sm:$0xff] %v1519
          %1648 = vst [vmem:[#allocation2 + $0x248] sm:$0xff] %v1520
          %1649 = vst [vmem:[#allocation2 + $0x250] sm:$0xff] %v1521
          %1650 = vst [vmem:[#allocation2 + $0x258] sm:$0xff] %v1522
          %1651 = vst [vmem:[#allocation2 + $0x260] sm:$0xff] %v1523
          %1652 = vst [vmem:[#allocation2 + $0x268] sm:$0xff] %v1524
          %1653 = vst [vmem:[#allocation2 + $0x270] sm:$0xff] %v1525
          %1654 = vst [vmem:[#allocation2 + $0x278] sm:$0xff] %v1526
          %1655 = vst [vmem:[#allocation2 + $0x280] sm:$0xff] %v1527
          %1656 = vst [vmem:[#allocation2 + $0x288] sm:$0xff] %v1528
          %1657 = vst [vmem:[#allocation2 + $0x290] sm:$0xff] %v1529
          %1658 = vst [vmem:[#allocation2 + $0x298] sm:$0xff] %v1530
          %1659 = vst [vmem:[#allocation2 + $0x2a0] sm:$0xff] %v1531
          %1660 = vst [vmem:[#allocation2 + $0x2a8] sm:$0xff] %v1532
          %1661 = vst [vmem:[#allocation2 + $0x2b0] sm:$0xff] %v1533
          %1662 = vst [vmem:[#allocation2 + $0x2b8] sm:$0xff] %v1534
          %1663 = vst [vmem:[#allocation2 + $0x2c0] sm:$0xff] %v1535
          %1664 = vst [vmem:[#allocation2 + $0x2c8] sm:$0xff] %v1536
          %1665 = vst [vmem:[#allocation2 + $0x2d0] sm:$0xff] %v1537
          %1666 = vst [vmem:[#allocation2 + $0x2d8] sm:$0xff] %v1538
          %1667 = vst [vmem:[#allocation2 + $0x2e0] sm:$0xff] %v1539
          %1668 = vst [vmem:[#allocation2 + $0x2e8] sm:$0xff] %v1540
          %1669 = vst [vmem:[#allocation2 + $0x2f0] sm:$0xff] %v1541
          %1670 = vst [vmem:[#allocation2 + $0x2f8] sm:$0xff] %v1542
          %1671 = vst [vmem:[#allocation2 + $0x300] sm:$0xff] %v1543
          %1672 = vst [vmem:[#allocation2 + $0x308] sm:$0xff] %v1544
          %1673 = vst [vmem:[#allocation2 + $0x310] sm:$0xff] %v1545
          %1674 = vst [vmem:[#allocation2 + $0x318] sm:$0xff] %v1546
          %1675 = vst [vmem:[#allocation2 + $0x320] sm:$0xff] %v1547
          %1676 = vst [vmem:[#allocation2 + $0x328] sm:$0xff] %v1548
          %1677 = vst [vmem:[#allocation2 + $0x330] sm:$0xff] %v1549
          %1678 = vst [vmem:[#allocation2 + $0x338] sm:$0xff] %v1550
          %1679 = vst [vmem:[#allocation2 + $0x340] sm:$0xff] %v1551
          %1680 = vst [vmem:[#allocation2 + $0x348] sm:$0xff] %v1552
          %1681 = vst [vmem:[#allocation2 + $0x350] sm:$0xff] %v1553
          %1682 = vst [vmem:[#allocation2 + $0x358] sm:$0xff] %v1554
          %1683 = vst [vmem:[#allocation2 + $0x360] sm:$0xff] %v1555
          %1684 = vst [vmem:[#allocation2 + $0x368] sm:$0xff] %v1556
          %1685 = vst [vmem:[#allocation2 + $0x370] sm:$0xff] %v1557
          %1686 = vst [vmem:[#allocation2 + $0x378] sm:$0xff] %v1558
          %1687 = vst [vmem:[#allocation2 + $0x380] sm:$0xff] %v1559
          %1688 = vst [vmem:[#allocation2 + $0x388] sm:$0xff] %v1560
          %1689 = vst [vmem:[#allocation2 + $0x390] sm:$0xff] %v1561
          %1690 = vst [vmem:[#allocation2 + $0x398] sm:$0xff] %v1562
          %1691 = vst [vmem:[#allocation2 + $0x3a0] sm:$0xff] %v1563
          %1692 = vst [vmem:[#allocation2 + $0x3a8] sm:$0xff] %v1564
          %1693 = vst [vmem:[#allocation2 + $0x3b0] sm:$0xff] %v1565
          %1694 = vst [vmem:[#allocation2 + $0x3b8] sm:$0xff] %v1566
          %1695 = vst [vmem:[#allocation2 + $0x3c0] sm:$0xff] %v1567
          %1696 = vst [vmem:[#allocation2 + $0x3c8] sm:$0xff] %v1568
          %1697 = vst [vmem:[#allocation2 + $0x3d0] sm:$0xff] %v1569
          %1698 = vst [vmem:[#allocation2 + $0x3d8] sm:$0xff] %v1570
          %1699 = vst [vmem:[#allocation2 + $0x3e0] sm:$0xff] %v1571
          %1700 = vst [vmem:[#allocation2 + $0x3e8] sm:$0xff] %v1572
          %1701 = vst [vmem:[#allocation2 + $0x3f0] sm:$0xff] %v1573
          %1702 = vst [vmem:[#allocation2 + $0x3f8] sm:$0xff] %v1574
        $region36: #{tpu_custom_call.1} parent=27 // pred_fallthru
          _
        %p1703 = scmp.eq.s32.totalorder %s21, 1
        // Predicated region
        $region37: #{tpu_custom_call.1} parent=27 // pred_check
          %p1704 = pneg %p1703
        $region38: #{tpu_custom_call.1} parent=27 // pred_check_branch
          %1706 = sbr.rel (%p1704) target = $region40
        $region39: #{tpu_custom_call.1} parent=27 // pred_region
          %v1707 = vld [vmem:[#allocation2] sm:$0xff]
          %v1708 = vld [vmem:[#allocation2 + $0x8] sm:$0xff]
          %v1709 = vld [vmem:[#allocation2 + $0x10] sm:$0xff]
          %v1710 = vld [vmem:[#allocation2 + $0x18] sm:$0xff]
          %v1711 = vld [vmem:[#allocation2 + $0x20] sm:$0xff]
          %v1712 = vld [vmem:[#allocation2 + $0x28] sm:$0xff]
          %v1713 = vld [vmem:[#allocation2 + $0x30] sm:$0xff]
          %v1714 = vld [vmem:[#allocation2 + $0x38] sm:$0xff]
          %v1715 = vld [vmem:[#allocation2 + $0x40] sm:$0xff]
          %v1716 = vld [vmem:[#allocation2 + $0x48] sm:$0xff]
          %v1717 = vld [vmem:[#allocation2 + $0x50] sm:$0xff]
          %v1718 = vld [vmem:[#allocation2 + $0x58] sm:$0xff]
          %v1719 = vld [vmem:[#allocation2 + $0x60] sm:$0xff]
          %v1720 = vld [vmem:[#allocation2 + $0x68] sm:$0xff]
          %v1721 = vld [vmem:[#allocation2 + $0x70] sm:$0xff]
          %v1722 = vld [vmem:[#allocation2 + $0x78] sm:$0xff]
          %v1723 = vld [vmem:[#allocation2 + $0x80] sm:$0xff]
          %v1724 = vld [vmem:[#allocation2 + $0x88] sm:$0xff]
          %v1725 = vld [vmem:[#allocation2 + $0x90] sm:$0xff]
          %v1726 = vld [vmem:[#allocation2 + $0x98] sm:$0xff]
          %v1727 = vld [vmem:[#allocation2 + $0xa0] sm:$0xff]
          %v1728 = vld [vmem:[#allocation2 + $0xa8] sm:$0xff]
          %v1729 = vld [vmem:[#allocation2 + $0xb0] sm:$0xff]
          %v1730 = vld [vmem:[#allocation2 + $0xb8] sm:$0xff]
          %v1731 = vld [vmem:[#allocation2 + $0xc0] sm:$0xff]
          %v1732 = vld [vmem:[#allocation2 + $0xc8] sm:$0xff]
          %v1733 = vld [vmem:[#allocation2 + $0xd0] sm:$0xff]
          %v1734 = vld [vmem:[#allocation2 + $0xd8] sm:$0xff]
          %v1735 = vld [vmem:[#allocation2 + $0xe0] sm:$0xff]
          %v1736 = vld [vmem:[#allocation2 + $0xe8] sm:$0xff]
          %v1737 = vld [vmem:[#allocation2 + $0xf0] sm:$0xff]
          %v1738 = vld [vmem:[#allocation2 + $0xf8] sm:$0xff]
          %v1739 = vld [vmem:[#allocation2 + $0x100] sm:$0xff]
          %v1740 = vld [vmem:[#allocation2 + $0x108] sm:$0xff]
          %v1741 = vld [vmem:[#allocation2 + $0x110] sm:$0xff]
          %v1742 = vld [vmem:[#allocation2 + $0x118] sm:$0xff]
          %v1743 = vld [vmem:[#allocation2 + $0x120] sm:$0xff]
          %v1744 = vld [vmem:[#allocation2 + $0x128] sm:$0xff]
          %v1745 = vld [vmem:[#allocation2 + $0x130] sm:$0xff]
          %v1746 = vld [vmem:[#allocation2 + $0x138] sm:$0xff]
          %v1747 = vld [vmem:[#allocation2 + $0x140] sm:$0xff]
          %v1748 = vld [vmem:[#allocation2 + $0x148] sm:$0xff]
          %v1749 = vld [vmem:[#allocation2 + $0x150] sm:$0xff]
          %v1750 = vld [vmem:[#allocation2 + $0x158] sm:$0xff]
          %v1751 = vld [vmem:[#allocation2 + $0x160] sm:$0xff]
          %v1752 = vld [vmem:[#allocation2 + $0x168] sm:$0xff]
          %v1753 = vld [vmem:[#allocation2 + $0x170] sm:$0xff]
          %v1754 = vld [vmem:[#allocation2 + $0x178] sm:$0xff]
          %v1755 = vld [vmem:[#allocation2 + $0x180] sm:$0xff]
          %v1756 = vld [vmem:[#allocation2 + $0x188] sm:$0xff]
          %v1757 = vld [vmem:[#allocation2 + $0x190] sm:$0xff]
          %v1758 = vld [vmem:[#allocation2 + $0x198] sm:$0xff]
          %v1759 = vld [vmem:[#allocation2 + $0x1a0] sm:$0xff]
          %v1760 = vld [vmem:[#allocation2 + $0x1a8] sm:$0xff]
          %v1761 = vld [vmem:[#allocation2 + $0x1b0] sm:$0xff]
          %v1762 = vld [vmem:[#allocation2 + $0x1b8] sm:$0xff]
          %v1763 = vld [vmem:[#allocation2 + $0x1c0] sm:$0xff]
          %v1764 = vld [vmem:[#allocation2 + $0x1c8] sm:$0xff]
          %v1765 = vld [vmem:[#allocation2 + $0x1d0] sm:$0xff]
          %v1766 = vld [vmem:[#allocation2 + $0x1d8] sm:$0xff]
          %v1767 = vld [vmem:[#allocation2 + $0x1e0] sm:$0xff]
          %v1768 = vld [vmem:[#allocation2 + $0x1e8] sm:$0xff]
          %v1769 = vld [vmem:[#allocation2 + $0x1f0] sm:$0xff]
          %v1770 = vld [vmem:[#allocation2 + $0x1f8] sm:$0xff]
          %v1771 = vld [vmem:[#allocation2 + $0x200] sm:$0xff]
          %v1772 = vld [vmem:[#allocation2 + $0x208] sm:$0xff]
          %v1773 = vld [vmem:[#allocation2 + $0x210] sm:$0xff]
          %v1774 = vld [vmem:[#allocation2 + $0x218] sm:$0xff]
          %v1775 = vld [vmem:[#allocation2 + $0x220] sm:$0xff]
          %v1776 = vld [vmem:[#allocation2 + $0x228] sm:$0xff]
          %v1777 = vld [vmem:[#allocation2 + $0x230] sm:$0xff]
          %v1778 = vld [vmem:[#allocation2 + $0x238] sm:$0xff]
          %v1779 = vld [vmem:[#allocation2 + $0x240] sm:$0xff]
          %v1780 = vld [vmem:[#allocation2 + $0x248] sm:$0xff]
          %v1781 = vld [vmem:[#allocation2 + $0x250] sm:$0xff]
          %v1782 = vld [vmem:[#allocation2 + $0x258] sm:$0xff]
          %v1783 = vld [vmem:[#allocation2 + $0x260] sm:$0xff]
          %v1784 = vld [vmem:[#allocation2 + $0x268] sm:$0xff]
          %v1785 = vld [vmem:[#allocation2 + $0x270] sm:$0xff]
          %v1786 = vld [vmem:[#allocation2 + $0x278] sm:$0xff]
          %v1787 = vld [vmem:[#allocation2 + $0x280] sm:$0xff]
          %v1788 = vld [vmem:[#allocation2 + $0x288] sm:$0xff]
          %v1789 = vld [vmem:[#allocation2 + $0x290] sm:$0xff]
          %v1790 = vld [vmem:[#allocation2 + $0x298] sm:$0xff]
          %v1791 = vld [vmem:[#allocation2 + $0x2a0] sm:$0xff]
          %v1792 = vld [vmem:[#allocation2 + $0x2a8] sm:$0xff]
          %v1793 = vld [vmem:[#allocation2 + $0x2b0] sm:$0xff]
          %v1794 = vld [vmem:[#allocation2 + $0x2b8] sm:$0xff]
          %v1795 = vld [vmem:[#allocation2 + $0x2c0] sm:$0xff]
          %v1796 = vld [vmem:[#allocation2 + $0x2c8] sm:$0xff]
          %v1797 = vld [vmem:[#allocation2 + $0x2d0] sm:$0xff]
          %v1798 = vld [vmem:[#allocation2 + $0x2d8] sm:$0xff]
          %v1799 = vld [vmem:[#allocation2 + $0x2e0] sm:$0xff]
          %v1800 = vld [vmem:[#allocation2 + $0x2e8] sm:$0xff]
          %v1801 = vld [vmem:[#allocation2 + $0x2f0] sm:$0xff]
          %v1802 = vld [vmem:[#allocation2 + $0x2f8] sm:$0xff]
          %v1803 = vld [vmem:[#allocation2 + $0x300] sm:$0xff]
          %v1804 = vld [vmem:[#allocation2 + $0x308] sm:$0xff]
          %v1805 = vld [vmem:[#allocation2 + $0x310] sm:$0xff]
          %v1806 = vld [vmem:[#allocation2 + $0x318] sm:$0xff]
          %v1807 = vld [vmem:[#allocation2 + $0x320] sm:$0xff]
          %v1808 = vld [vmem:[#allocation2 + $0x328] sm:$0xff]
          %v1809 = vld [vmem:[#allocation2 + $0x330] sm:$0xff]
          %v1810 = vld [vmem:[#allocation2 + $0x338] sm:$0xff]
          %v1811 = vld [vmem:[#allocation2 + $0x340] sm:$0xff]
          %v1812 = vld [vmem:[#allocation2 + $0x348] sm:$0xff]
          %v1813 = vld [vmem:[#allocation2 + $0x350] sm:$0xff]
          %v1814 = vld [vmem:[#allocation2 + $0x358] sm:$0xff]
          %v1815 = vld [vmem:[#allocation2 + $0x360] sm:$0xff]
          %v1816 = vld [vmem:[#allocation2 + $0x368] sm:$0xff]
          %v1817 = vld [vmem:[#allocation2 + $0x370] sm:$0xff]
          %v1818 = vld [vmem:[#allocation2 + $0x378] sm:$0xff]
          %v1819 = vld [vmem:[#allocation2 + $0x380] sm:$0xff]
          %v1820 = vld [vmem:[#allocation2 + $0x388] sm:$0xff]
          %v1821 = vld [vmem:[#allocation2 + $0x390] sm:$0xff]
          %v1822 = vld [vmem:[#allocation2 + $0x398] sm:$0xff]
          %v1823 = vld [vmem:[#allocation2 + $0x3a0] sm:$0xff]
          %v1824 = vld [vmem:[#allocation2 + $0x3a8] sm:$0xff]
          %v1825 = vld [vmem:[#allocation2 + $0x3b0] sm:$0xff]
          %v1826 = vld [vmem:[#allocation2 + $0x3b8] sm:$0xff]
          %v1827 = vld [vmem:[#allocation2 + $0x3c0] sm:$0xff]
          %v1828 = vld [vmem:[#allocation2 + $0x3c8] sm:$0xff]
          %v1829 = vld [vmem:[#allocation2 + $0x3d0] sm:$0xff]
          %v1830 = vld [vmem:[#allocation2 + $0x3d8] sm:$0xff]
          %v1831 = vld [vmem:[#allocation2 + $0x3e0] sm:$0xff]
          %v1832 = vld [vmem:[#allocation2 + $0x3e8] sm:$0xff]
          %v1833 = vld [vmem:[#allocation2 + $0x3f0] sm:$0xff]
          %v1834 = vld [vmem:[#allocation2 + $0x3f8] sm:$0xff]
          %v1835 = vmin.f32 %v1707, %v1711
          %v1836 = vmin.f32 %v1835, %v1715
          %v1837 = vmin.f32 %v1836, %v1719
          %v1838 = vmin.f32 %v1837, %v1723
          %v1839 = vmin.f32 %v1838, %v1727
          %v1840 = vmin.f32 %v1839, %v1731
          %v1841 = vmin.f32 %v1840, %v1735
          %v1842 = vmin.f32 %v1841, %v1739
          %v1843 = vmin.f32 %v1842, %v1743
          %v1844 = vmin.f32 %v1843, %v1747
          %v1845 = vmin.f32 %v1844, %v1751
          %v1846 = vmin.f32 %v1845, %v1755
          %v1847 = vmin.f32 %v1846, %v1759
          %v1848 = vmin.f32 %v1847, %v1763
          %v1849 = vmin.f32 %v1848, %v1767
          %v1850 = vmin.f32 %v1849, %v1771
          %v1851 = vmin.f32 %v1850, %v1775
          %v1852 = vmin.f32 %v1851, %v1779
          %v1853 = vmin.f32 %v1852, %v1783
          %v1854 = vmin.f32 %v1853, %v1787
          %v1855 = vmin.f32 %v1854, %v1791
          %v1856 = vmin.f32 %v1855, %v1795
          %v1857 = vmin.f32 %v1856, %v1799
          %v1858 = vmin.f32 %v1857, %v1803
          %v1859 = vmin.f32 %v1858, %v1807
          %v1860 = vmin.f32 %v1859, %v1811
          %v1861 = vmin.f32 %v1860, %v1815
          %v1862 = vmin.f32 %v1861, %v1819
          %v1863 = vmin.f32 %v1862, %v1823
          %v1864 = vmin.f32 %v1863, %v1827
          %v1865 = vmin.f32 %v1864, %v1831
          %v1866 = vrot.slane %v1865, 4
          %v1867 = vmin.f32 %v1865, %v1866
          %v1868 = vrot.slane %v1867, 2
          %v1869 = vmin.f32 %v1867, %v1868
          %v1870 = vrot.slane %v1869, 1
          %v1871 = vmin.f32 %v1869, %v1870
          %v1872 = vmin.f32 %v1708, %v1712
          %v1873 = vmin.f32 %v1872, %v1716
          %v1874 = vmin.f32 %v1873, %v1720
          %v1875 = vmin.f32 %v1874, %v1724
          %v1876 = vmin.f32 %v1875, %v1728
          %v1877 = vmin.f32 %v1876, %v1732
          %v1878 = vmin.f32 %v1877, %v1736
          %v1879 = vmin.f32 %v1878, %v1740
          %v1880 = vmin.f32 %v1879, %v1744
          %v1881 = vmin.f32 %v1880, %v1748
          %v1882 = vmin.f32 %v1881, %v1752
          %v1883 = vmin.f32 %v1882, %v1756
          %v1884 = vmin.f32 %v1883, %v1760
          %v1885 = vmin.f32 %v1884, %v1764
          %v1886 = vmin.f32 %v1885, %v1768
          %v1887 = vmin.f32 %v1886, %v1772
          %v1888 = vmin.f32 %v1887, %v1776
          %v1889 = vmin.f32 %v1888, %v1780
          %v1890 = vmin.f32 %v1889, %v1784
          %v1891 = vmin.f32 %v1890, %v1788
          %v1892 = vmin.f32 %v1891, %v1792
          %v1893 = vmin.f32 %v1892, %v1796
          %v1894 = vmin.f32 %v1893, %v1800
          %v1895 = vmin.f32 %v1894, %v1804
          %v1896 = vmin.f32 %v1895, %v1808
          %v1897 = vmin.f32 %v1896, %v1812
          %v1898 = vmin.f32 %v1897, %v1816
          %v1899 = vmin.f32 %v1898, %v1820
          %v1900 = vmin.f32 %v1899, %v1824
          %v1901 = vmin.f32 %v1900, %v1828
          %v1902 = vmin.f32 %v1901, %v1832
          %v1903 = vrot.slane %v1902, 4
          %v1904 = vmin.f32 %v1902, %v1903
          %v1905 = vrot.slane %v1904, 2
          %v1906 = vmin.f32 %v1904, %v1905
          %v1907 = vrot.slane %v1906, 1
          %v1908 = vmin.f32 %v1906, %v1907
          %v1909 = vmin.f32 %v1709, %v1713
          %v1910 = vmin.f32 %v1909, %v1717
          %v1911 = vmin.f32 %v1910, %v1721
          %v1912 = vmin.f32 %v1911, %v1725
          %v1913 = vmin.f32 %v1912, %v1729
          %v1914 = vmin.f32 %v1913, %v1733
          %v1915 = vmin.f32 %v1914, %v1737
          %v1916 = vmin.f32 %v1915, %v1741
          %v1917 = vmin.f32 %v1916, %v1745
          %v1918 = vmin.f32 %v1917, %v1749
          %v1919 = vmin.f32 %v1918, %v1753
          %v1920 = vmin.f32 %v1919, %v1757
          %v1921 = vmin.f32 %v1920, %v1761
          %v1922 = vmin.f32 %v1921, %v1765
          %v1923 = vmin.f32 %v1922, %v1769
          %v1924 = vmin.f32 %v1923, %v1773
          %v1925 = vmin.f32 %v1924, %v1777
          %v1926 = vmin.f32 %v1925, %v1781
          %v1927 = vmin.f32 %v1926, %v1785
          %v1928 = vmin.f32 %v1927, %v1789
          %v1929 = vmin.f32 %v1928, %v1793
          %v1930 = vmin.f32 %v1929, %v1797
          %v1931 = vmin.f32 %v1930, %v1801
          %v1932 = vmin.f32 %v1931, %v1805
          %v1933 = vmin.f32 %v1932, %v1809
          %v1934 = vmin.f32 %v1933, %v1813
          %v1935 = vmin.f32 %v1934, %v1817
          %v1936 = vmin.f32 %v1935, %v1821
          %v1937 = vmin.f32 %v1936, %v1825
          %v1938 = vmin.f32 %v1937, %v1829
          %v1939 = vmin.f32 %v1938, %v1833
          %v1940 = vrot.slane %v1939, 4
          %v1941 = vmin.f32 %v1939, %v1940
          %v1942 = vrot.slane %v1941, 2
          %v1943 = vmin.f32 %v1941, %v1942
          %v1944 = vrot.slane %v1943, 1
          %v1945 = vmin.f32 %v1943, %v1944
          %v1946 = vmin.f32 %v1710, %v1714
          %v1947 = vmin.f32 %v1946, %v1718
          %v1948 = vmin.f32 %v1947, %v1722
          %v1949 = vmin.f32 %v1948, %v1726
          %v1950 = vmin.f32 %v1949, %v1730
          %v1951 = vmin.f32 %v1950, %v1734
          %v1952 = vmin.f32 %v1951, %v1738
          %v1953 = vmin.f32 %v1952, %v1742
          %v1954 = vmin.f32 %v1953, %v1746
          %v1955 = vmin.f32 %v1954, %v1750
          %v1956 = vmin.f32 %v1955, %v1754
          %v1957 = vmin.f32 %v1956, %v1758
          %v1958 = vmin.f32 %v1957, %v1762
          %v1959 = vmin.f32 %v1958, %v1766
          %v1960 = vmin.f32 %v1959, %v1770
          %v1961 = vmin.f32 %v1960, %v1774
          %v1962 = vmin.f32 %v1961, %v1778
          %v1963 = vmin.f32 %v1962, %v1782
          %v1964 = vmin.f32 %v1963, %v1786
          %v1965 = vmin.f32 %v1964, %v1790
          %v1966 = vmin.f32 %v1965, %v1794
          %v1967 = vmin.f32 %v1966, %v1798
          %v1968 = vmin.f32 %v1967, %v1802
          %v1969 = vmin.f32 %v1968, %v1806
          %v1970 = vmin.f32 %v1969, %v1810
          %v1971 = vmin.f32 %v1970, %v1814
          %v1972 = vmin.f32 %v1971, %v1818
          %v1973 = vmin.f32 %v1972, %v1822
          %v1974 = vmin.f32 %v1973, %v1826
          %v1975 = vmin.f32 %v1974, %v1830
          %v1976 = vmin.f32 %v1975, %v1834
          %v1977 = vrot.slane %v1976, 4
          %v1978 = vmin.f32 %v1976, %v1977
          %v1979 = vrot.slane %v1978, 2
          %v1980 = vmin.f32 %v1978, %v1979
          %v1981 = vrot.slane %v1980, 1
          %v1982 = vmin.f32 %v1980, %v1981
          %v1983 = vrsqrt.pop %v1871
          %v1984 = vmul.f32 %v1871, %v1983
          %vm1985 = vcmp.eq.f32.partialorder %v1871, inf
          %v1986 = vsel %vm1985, %v1871, %v1984
          %vm1987 = vcmp.eq.f32.partialorder %v1871, 0.0
          %v1988 = vand.u32 %v1871, 2147483648
          %v1989 = vsel %vm1987, %v1988, %v1986
          %v1990 = vrsqrt.pop %v1908
          %v1991 = vmul.f32 %v1908, %v1990
          %vm1992 = vcmp.eq.f32.partialorder %v1908, inf
          %v1993 = vsel %vm1992, %v1908, %v1991
          %vm1994 = vcmp.eq.f32.partialorder %v1908, 0.0
          %v1995 = vand.u32 %v1908, 2147483648
          %v1996 = vsel %vm1994, %v1995, %v1993
          %v1997 = vrsqrt.pop %v1945
          %v1998 = vmul.f32 %v1945, %v1997
          %vm1999 = vcmp.eq.f32.partialorder %v1945, inf
          %v2000 = vsel %vm1999, %v1945, %v1998
          %vm2001 = vcmp.eq.f32.partialorder %v1945, 0.0
          %v2002 = vand.u32 %v1945, 2147483648
          %v2003 = vsel %vm2001, %v2002, %v2000
          %v2004 = vrsqrt.pop %v1982
          %v2005 = vmul.f32 %v1982, %v2004
          %vm2006 = vcmp.eq.f32.partialorder %v1982, inf
          %v2007 = vsel %vm2006, %v1982, %v2005
          %vm2008 = vcmp.eq.f32.partialorder %v1982, 0.0
          %v2009 = vand.u32 %v1982, 2147483648
          %v2010 = vsel %vm2008, %v2009, %v2007
          %v2015 = vcombine.low %v1989, %v1996
          %v2016 = vcombine.low %v2003, %v2010
          %v2018 = vunpack.c.l.s4 1966171168
          %v2019 = vunpack.c.0.s8 %v2018
          %v2020 = vlaneseq
          %v2021 = vshrl.u32 %v2020, 7
          %v2022 = vsub.s32 %v2019, %v2021
          %v2023 = vrot.slane %v2015, %v2022
          %v2025 = vunpack.c.l.s4 1966171168
          %v2026 = vunpack.c.0.s8 %v2025
          %v2027 = vlaneseq
          %v2028 = vshrl.u32 %v2027, 7
          %v2029 = vsub.s32 %v2026, %v2028
          %v2030 = vrot.slane %v2016, %v2029
          %v2031 = vcombine.low %v2023, %v2030
          %v2033 = vunpack.c.l.s4 1966171168
          %v2034 = vunpack.c.0.s8 %v2033
          %v2035 = vlaneseq
          %v2036 = vshrl.u32 %v2035, 7
          %v2037 = vsub.s32 %v2034, %v2036
          %v2038 = vrot.slane %v2031, %v2037
          %v2040 = vlaneseq
          %vm2041 = vcmp.ge.s32.totalorder %v2040, 0
          %vm2042 = vcmp.lt.s32.totalorder %v2040, 512
          %vm2043 = vmand %vm2041, %vm2042
          %2044 = vst.msk [vmem:[%s165] sm:$0xf] %vm2043, %v2038
        $region40: #{tpu_custom_call.1} parent=27 // pred_fallthru
          _
        %s2045 = sand.u32 %s88, 1
        %s2046 = scalar_lea.sflag [#allocation4], %s2045
        %s2047 = sand.u32 %s88, 1
        %s2048 = smul.addr %s2047, 4
        %s2049 = scalar_lea.vmem [#allocation3], %s2048
        // Predicated region
        $region41: #{tpu_custom_call.1} parent=27 // pred_check
          %p2050 = pneg %p98
        $region42: #{tpu_custom_call.1} parent=27 // pred_check_branch
          %2052 = sbr.rel (%p2050) target = $region44
        $region43: #{tpu_custom_call.1} parent=27 // pred_region
          %s2054 = ssub.s32 64, 64
          %2055 = vsyncadd %s2046, %s2054
          %s2056 = smul.addr %s20, 4
          %s2057 = smul.addr %s2056, 16
          %s2058 = scalar_lea.hbm %s2, %s2057
          %s2060 = sshll.u32 %s2049, 4
          %s2061 = int_to_ptr.vmem [resolvable:$true] %s2060
          %2063 = dma.vmem_to_hbm [thread:$0]  %s2061, 64, %s2058, %s2046
        $region44: #{tpu_custom_call.1} parent=27 // pred_fallthru
          _
      $region28: #{tpu_custom_call.1} parent=5 // pred_fallthru
        _
      %p2064 = scmp.le.s32.totalorder 2, %s11
      // Predicated region
      $region45: #{tpu_custom_call.1} parent=5 // pred_check
        %p2065 = pneg %p2064
      $region46: #{tpu_custom_call.1} parent=5 // pred_check_branch
        %2067 = sbr.rel (%p2065) target = $region48
      $region47: #{tpu_custom_call.1} parent=5 // pred_region
        %s2068 = ssub.s32 %s11, 2
        // Predicated region
        $region49: #{tpu_custom_call.1} parent=47 // pred_check
          %p2069 = pneg %p104
        $region50: #{tpu_custom_call.1} parent=47 // pred_check_branch
          %2071 = sbr.rel (%p2069) target = $region52
        $region51: #{tpu_custom_call.1} parent=47 // pred_region
          %s2072 = sand.u32 %s89, 1
          %s2073 = scalar_lea.sflag [#allocation4], %s2072
          %s2074 = sand.u32 %s89, 1
          %s2075 = smul.addr %s2074, 4
          %s2076 = scalar_lea.vmem [#allocation3], %s2075
          %2077 = dma.done %s2073, 64
        $region52: #{tpu_custom_call.1} parent=47 // pred_fallthru
          _
      $region48: #{tpu_custom_call.1} parent=5 // pred_fallthru
        _
    $region6: #{tpu_custom_call.1} parent=1 // loop_footer
      %s15 = sadd.s32 1, %s11
    $region7: #{tpu_custom_call.1} parent=1 // loop_footer_branch
      %10 = sbr.rel target = $region3
    $region8: #{tpu_custom_call.1} parent=1 // loop_exit
      _
    %2078 = vsyncpa [#allocation4], 1
    %s2079 = scalar_lea.sflag [#allocation4], 1
    %2080 = vsyncpa %s2079, 1

</llo_original>
